<compile_context>
chip_gen: v7x
topology: tpu7x:2x2x1
jax: 0.10.0
libtpu: 0.0.40
codegen_flags: <defaults>
</compile_context>

<pallas_src>
import functools

import numpy as np
import jax
import jax.numpy as jnp
from jax import lax
from jax.experimental import pallas as pl
from jax.experimental.pallas import tpu as pltpu

EPS = 1e-5


# --------------------------- weight / mask packing --------------------------- #

def _fold_group_tap(wt, ky, kx, inplanes, groups):
    """(mid_c, Cin/groups, 3, 3) grouped-conv tap -> dense block-diag (mid_c, Cin)."""
    mid_c = wt.shape[0]
    cpg_in = inplanes // groups
    cpg_out = mid_c // groups
    full = jnp.zeros((mid_c, inplanes), jnp.float32)
    for g in range(groups):
        full = full.at[g * cpg_out:(g + 1) * cpg_out,
                       g * cpg_in:(g + 1) * cpg_in].set(
            wt[g * cpg_out:(g + 1) * cpg_out, :, ky, kx])
    return full


def pack_spatial_weights(params, dilations, H, W, groups):
    """Pack every spatial-branch conv weight into one (C5, K_all) bf16 matrix,
    plus per-tap zero-padding masks and static flat spatial offsets."""
    w0 = params['w0']                                  # (mid_c, Cin)
    mid_c, Cin = w0.shape
    n_dil = len(dilations)
    C5 = (1 + n_dil) * mid_c
    HW = H * W

    # K-block 0 ("centre"): the 1x1 conv + every dilated branch's centre tap.
    centre = jnp.zeros((C5, Cin), jnp.float32).at[:mid_c].set(w0)
    for bi in range(n_dil):
        centre = centre.at[(1 + bi) * mid_c:(2 + bi) * mid_c].set(
            _fold_group_tap(params['w3'][bi], 1, 1, Cin, groups))

    blocks = [centre]
    offs = []
    mask_rows = []
    hh = np.arange(HW) // W
    ww = np.arange(HW) % W
    for bi, d in enumerate(dilations):
        for ky in range(3):
            dy = (ky - 1) * d
            if abs(dy) >= H:                 # tap reads only zero padding -> drop
                continue
            for kx in range(3):
                dx = (kx - 1) * d
                if abs(dx) >= W:
                    continue
                if dy == 0 and dx == 0:
                    continue                 # centre tap already packed
                blk = jnp.zeros((C5, Cin), jnp.float32)
                blk = blk.at[(1 + bi) * mid_c:(2 + bi) * mid_c].set(
                    _fold_group_tap(params['w3'][bi], ky, kx, Cin, groups))
                blocks.append(blk)
                offs.append(dy * W + dx)
                mask_rows.append(((hh + dy >= 0) & (hh + dy < H) &
                                  (ww + dx >= 0) & (ww + dx < W)
                                  ).astype(np.float32))

    wall = jnp.concatenate(blocks, axis=1).astype(jnp.bfloat16)   # (C5, K_all)
    if mask_rows:
        masks = jnp.asarray(np.stack(mask_rows, axis=0))          # (n_off, HW)
    else:
        masks = jnp.ones((1, HW), jnp.float32)                    # dummy, unused
    return wall, masks, tuple(offs)


# ------------------------------ Pallas kernels ------------------------------ #

def branches_kernel(x_ref, wall_ref, mask_ref, y_ref, *, offs, HW):
    """All spatial ASPP branches (pre-BN) for one image, channel-major.

    x_ref   : (Cin, HW)   f32   one image, channel-major (lane dim = HW)
    wall_ref: (C5, K_all) bf16  packed [1x1 | centre taps | off-centre taps]
    mask_ref: (n_off, HW) f32   zero-padding validity mask per off-centre tap
    y_ref   : (C5, HW)    f32   pre-BN branch outputs (concat channel order)
    """
    xf = x_ref[...]                                        # (Cin, HW) f32
    blocks = [xf.astype(jnp.bfloat16)]
    if offs:
        m = mask_ref[...]
        for t, off in enumerate(offs):
            # window[:, i] = x[:, i + off] where the tap stays in-bounds, else 0.
            shifted = pltpu.roll(xf, shift=(-off) % HW, axis=1)   # XLU lane rotate
            blocks.append((shifted * m[t:t + 1, :]).astype(jnp.bfloat16))
    x_all = blocks[0] if len(blocks) == 1 else jnp.concatenate(blocks, axis=0)
    # Single consolidated MXU matmul covering every branch and every tap.
    y_ref[...] = jnp.dot(wall_ref[...], x_all,
                         preferred_element_type=jnp.float32)


def out_conv_kernel(y_ref, gp_ref, scale_ref, shift_ref, wsp_ref, o_ref):
    """Fused branch BN+ReLU -> concat -> out_conv (pre-BN), channel-major.

    y_ref    : (C5, HW)    f32   pre-BN spatial branches
    gp_ref   : (out_c, 1)  f32   global-pool branch's out_conv contribution
    scale/shift_ref : (C5, 1) f32 folded branch-BN affine
    wsp_ref  : (out_c, C5) bf16  out_conv rows for the spatial branches
    o_ref    : (out_c, HW) f32   pre-BN out_conv output (lane-dense)
    """
    z = jnp.maximum(y_ref[...] * scale_ref[...] + shift_ref[...], 0.0)
    o = jnp.dot(wsp_ref[...], z.astype(jnp.bfloat16),
                preferred_element_type=jnp.float32)
    o_ref[...] = o + gp_ref[...]


# ---------------------------- pallas_call wrappers --------------------------- #

def _run_branches(x2d, wall, masks, offs):
    N, Cin, HW = x2d.shape
    C5, K_all = wall.shape
    n_off = masks.shape[0]
    flops = 2 * N * C5 * K_all * HW
    bytes_accessed = int(x2d.size * 4 + wall.size * 2 + masks.size * 4
                         + N * C5 * HW * 4)
    kern = functools.partial(branches_kernel, offs=offs, HW=HW)
    return pl.pallas_call(
        kern,
        grid=(N,),
        in_specs=[
            pl.BlockSpec((None, Cin, HW), lambda n: (n, 0, 0)),
            pl.BlockSpec((C5, K_all), lambda n: (0, 0)),
            pl.BlockSpec((n_off, HW), lambda n: (0, 0)),
        ],
        out_specs=pl.BlockSpec((None, C5, HW), lambda n: (n, 0, 0)),
        out_shape=jax.ShapeDtypeStruct((N, C5, HW), jnp.float32),
        compiler_params=pltpu.CompilerParams(dimension_semantics=("parallel",)),
        cost_estimate=pl.CostEstimate(flops=flops, transcendentals=0,
                                      bytes_accessed=bytes_accessed),
    )(x2d, wall, masks)


def _run_out_conv(y_pre, gp_out, scale, shift, wsp_t):
    N, C5, HW = y_pre.shape
    out_c = wsp_t.shape[0]
    flops = 2 * N * out_c * C5 * HW
    bytes_accessed = int(y_pre.size * 4 + gp_out.size * 4 + wsp_t.size * 2
                         + (scale.size + shift.size) * 4 + N * out_c * HW * 4)
    return pl.pallas_call(
        out_conv_kernel,
        grid=(N,),
        in_specs=[
            pl.BlockSpec((None, C5, HW), lambda n: (n, 0, 0)),
            pl.BlockSpec((None, out_c, 1), lambda n: (n, 0, 0)),
            pl.BlockSpec((C5, 1), lambda n: (0, 0)),
            pl.BlockSpec((C5, 1), lambda n: (0, 0)),
            pl.BlockSpec((out_c, C5), lambda n: (0, 0)),
        ],
        out_specs=pl.BlockSpec((None, out_c, HW), lambda n: (n, 0, 0)),
        out_shape=jax.ShapeDtypeStruct((N, out_c, HW), jnp.float32),
        compiler_params=pltpu.CompilerParams(dimension_semantics=("parallel",)),
        cost_estimate=pl.CostEstimate(flops=flops, transcendentals=0,
                                      bytes_accessed=bytes_accessed),
    )(y_pre, gp_out, scale, shift, wsp_t)


# ---------------------------- parameter construction ------------------------- #

def init_params(key, inplanes, mid_c, dilations, out_c, groups=4):
    f32 = jnp.float32
    n_dil = len(dilations)
    keys = jax.random.split(key, 3 + n_dil)
    cpg_in = inplanes // groups
    cat_c = mid_c * (2 + n_dil)
    params = {
        # aspp[0] 1x1 conv: kaiming_normal_, fan_in = inplanes.
        'w0': jax.random.normal(keys[0], (mid_c, inplanes), f32)
              * jnp.sqrt(2.0 / inplanes),
        # aspp[1:] grouped dilated 3x3 convs: kaiming_normal_, fan_in = cpg_in*9.
        'w3': jnp.stack([jax.random.normal(keys[1 + i], (mid_c, cpg_in, 3, 3), f32)
                         * jnp.sqrt(2.0 / (cpg_in * 9)) for i in range(n_dil)]),
        # global_pool / out_conv 1x1 convs keep PyTorch's default init; a fan-in
        # scaled normal is used here (distribution differs slightly, forward math
        # is identical).
        'wgp': jax.random.normal(keys[-2], (mid_c, inplanes), f32)
               * jnp.sqrt(1.0 / inplanes),
        'wout': jax.random.normal(keys[-1], (out_c, cat_c), f32)
                * jnp.sqrt(1.0 / cat_c),
    }
    # All BatchNorms have gamma=1 / beta=0 (module _init_weight + torch defaults),
    # so no affine parameters are stored.
    return params


# ----------------------------------- forward --------------------------------- #

def _bn_affine_nc_hw(x):
    """Exact train-mode BN (gamma=1, beta=0, biased var) folded to an affine.
    x: (N, C, HW) -> per-channel (scale, shift) each of shape (C,)."""
    mean = jnp.mean(x, axis=(0, 2))
    var = jnp.mean(jnp.square(x - mean[None, :, None]), axis=(0, 2))
    scale = lax.rsqrt(var + EPS)
    return scale, -mean * scale


def aspp_center_block(x_nchw, params, *, dilations, groups=4):
    N, Cin, H, W = x_nchw.shape
    HW = H * W
    mid_c = params['w0'].shape[0]
    out_c = params['wout'].shape[0]

    wall, masks, offs = pack_spatial_weights(params, dilations, H, W, groups)
    x2d = x_nchw.reshape(N, Cin, HW).astype(jnp.float32)   # channel-major, lane=HW

    # Stage A: all spatial branches (pre-BN), one consolidated matmul per image.
    y_pre = _run_branches(x2d, wall, masks, offs)          # (N, C5, HW)

    # Branch BatchNorm (exact global batch statistics) folded to an affine.
    scale_sp, shift_sp = _bn_affine_nc_hw(y_pre)           # (C5,), (C5,)

    # Global-pool branch: AdaptiveMaxPool2d((1,1)) -> 1x1 conv -> BN(over N) ->
    # ReLU.  The bilinear(align_corners=True) upsample of a 1x1 map is a
    # per-image constant, so its out_conv contribution is a per-image (out_c,)
    # vector added inside stage B.  All of this touches only N*Cin scalars.
    pooled = jnp.max(x2d, axis=2)                          # (N, Cin)
    y_gp = pooled @ params['wgp'].T                        # (N, mid_c)
    g_mean = jnp.mean(y_gp, axis=0)
    g_var = jnp.mean(jnp.square(y_gp - g_mean[None, :]), axis=0)
    gp_act = jnp.maximum((y_gp - g_mean[None, :])
                         * lax.rsqrt(g_var + EPS)[None, :], 0.0)
    gp_out = (gp_act @ params['wout'][:, :mid_c].T)[:, :, None]   # (N, out_c, 1)

    # Stage B: fused branch BN+ReLU -> concat -> out_conv (pre-BN).
    wsp_t = params['wout'][:, mid_c:].astype(jnp.bfloat16)        # (out_c, C5)
    o_pre = _run_out_conv(y_pre, gp_out, scale_sp[:, None],
                          shift_sp[:, None], wsp_t)               # (N, out_c, HW)

    # Output BatchNorm + ReLU: tiny elementwise, left to XLA (fused with reshape).
    scale_o, shift_o = _bn_affine_nc_hw(o_pre)
    out = jnp.maximum(o_pre * scale_o[None, :, None] + shift_o[None, :, None], 0.0)
    return out.reshape(N, out_c, H, W)                            # NCHW, free reshape


# ------------------------------ pure-XLA reference ---------------------------- #

def reference_forward(x, params, *, dilations, groups=4):
    """Plain-XLA f32 reference of ASPPCenterBlock.forward (train-mode BN)."""
    N, Cin, H, W = x.shape
    mid_c = params['w0'].shape[0]

    def bn_relu(y):                                    # y: (N, C, H, W)
        mean = jnp.mean(y, axis=(0, 2, 3), keepdims=True)
        var = jnp.mean(jnp.square(y - mean), axis=(0, 2, 3), keepdims=True)
        return jnp.maximum((y - mean) * lax.rsqrt(var + EPS), 0.0)

    xs = [bn_relu(jnp.einsum('nchw,oc->nohw', x, params['w0']))]
    for bi, d in enumerate(dilations):
        y = lax.conv_general_dilated(
            x, params['w3'][bi], window_strides=(1, 1),
            padding=[(d, d), (d, d)], rhs_dilation=(d, d),
            dimension_numbers=('NCHW', 'OIHW', 'NCHW'),
            feature_group_count=groups)
        xs.append(bn_relu(y))

    pooled = jnp.max(x, axis=(2, 3), keepdims=True)                 # (N, Cin, 1, 1)
    g = bn_relu(jnp.einsum('nchw,oc->nohw', pooled, params['wgp']))
    g = jnp.broadcast_to(g, (N, mid_c, H, W))   # bilinear upsample of 1x1 = const

    cat = jnp.concatenate([g] + xs, axis=1)
    out = jnp.einsum('nchw,oc->nohw', cat, params['wout'])
    return bn_relu(out)


# ------------------------------------ main ----------------------------------- #

if __name__ == "__main__":
    # Small shapes consistent with the module (inplanes % 4 == 0, mid_c % 4 == 0).
    N, inplanes, H, W = 2, 16, 16, 16
    mid_c, out_c = 8, 8
    dilations = (6, 12, 18, 24)

    key = jax.random.PRNGKey(0)
    kx, kp = jax.random.split(key)
    x = jax.random.normal(kx, (N, inplanes, H, W), dtype=jnp.float32)   # NCHW
    params = init_params(kp, inplanes, mid_c, dilations, out_c)

    fwd = jax.jit(functools.partial(aspp_center_block, dilations=dilations))
    y = jax.block_until_ready(fwd(x, params))

    assert y.shape == (N, out_c, H, W), y.shape
    assert bool(jnp.all(jnp.isfinite(y)))
    assert bool(jnp.all(y >= 0.0))                     # ReLU output

    # Correctness check against the pure-XLA reference (kernel matmuls are bf16
    # with f32 accumulation -> loose tolerance; values are O(1) after BN).
    ref = jax.jit(functools.partial(reference_forward,
                                    dilations=dilations))(x, params)
    err = float(jnp.max(jnp.abs(y - ref)))
    assert err < 1e-1, f"max abs error vs reference: {err}"

    print("KERNEL_OK")
</pallas_src>

<mosaic_0001>
module attributes {stable_mosaic.version = 11 : i64} {
  func.func @branches_kernel(%arg0: i32, %arg1: memref<1x16x256xf32, #tpu.memory_space<vmem>>, %arg2: memref<40x272xbf16, #tpu.memory_space<vmem>>, %arg3: memref<16x256xf32, #tpu.memory_space<vmem>>, %arg4: memref<1x40x256xf32, #tpu.memory_space<vmem>>) attributes {dimension_semantics = [#tpu.dimension_semantics<parallel>], iteration_bounds = array<i64: 2>, scalar_prefetch = 0 : i64, scratch_operands = 0 : i64, tpu.core_type = #tpu.core_type<tc>, window_params = [{transform_indices = @transform_0, window_bounds = array<i64: 1, 16, 256>}, {pipeline_mode = #tpu.pipeline_mode<synchronous>, transform_indices = @transform_1, window_bounds = array<i64: 40, 272>}, {pipeline_mode = #tpu.pipeline_mode<synchronous>, transform_indices = @transform_2, window_bounds = array<i64: 16, 256>}, {transform_indices = @transform_3, window_bounds = array<i64: 1, 40, 256>}]} {
    %c0 = arith.constant 0 : index
    %c0_0 = arith.constant 0 : index
    %c0_1 = arith.constant 0 : index
    %0 = vector.load %arg1[%c0, %c0_0, %c0_1] : memref<1x16x256xf32, #tpu.memory_space<vmem>>, vector<1x16x256xf32>
    %1 = vector.shape_cast %0 : vector<1x16x256xf32> to vector<16x256xf32>
    %2 = arith.truncf %1 : vector<16x256xf32> to vector<16x256xbf16>
    %c0_2 = arith.constant 0 : index
    %c0_3 = arith.constant 0 : index
    %3 = vector.load %arg3[%c0_2, %c0_3] : memref<16x256xf32, #tpu.memory_space<vmem>>, vector<16x256xf32>
    %c102_i32 = arith.constant 102 : i32
    %4 = tpu.dynamic_rotate %1 by %c102_i32 dim 1 : vector<16x256xf32>, i32 -> vector<16x256xf32>
    %5 = vector.extract_strided_slice %3 {offsets = [0, 0], sizes = [1, 256], strides = [1, 1]} : vector<16x256xf32> to vector<1x256xf32>
    %6 = vector.broadcast %5 : vector<1x256xf32> to vector<16x256xf32>
    %7 = arith.mulf %4, %6 : vector<16x256xf32>
    %8 = arith.truncf %7 : vector<16x256xf32> to vector<16x256xbf16>
    %c96_i32 = arith.constant 96 : i32
    %9 = tpu.dynamic_rotate %1 by %c96_i32 dim 1 : vector<16x256xf32>, i32 -> vector<16x256xf32>
    %10 = vector.extract_strided_slice %3 {offsets = [1, 0], sizes = [1, 256], strides = [1, 1]} : vector<16x256xf32> to vector<1x256xf32>
    %11 = vector.broadcast %10 : vector<1x256xf32> to vector<16x256xf32>
    %12 = arith.mulf %9, %11 : vector<16x256xf32>
    %13 = arith.truncf %12 : vector<16x256xf32> to vector<16x256xbf16>
    %c90_i32 = arith.constant 90 : i32
    %14 = tpu.dynamic_rotate %1 by %c90_i32 dim 1 : vector<16x256xf32>, i32 -> vector<16x256xf32>
    %15 = vector.extract_strided_slice %3 {offsets = [2, 0], sizes = [1, 256], strides = [1, 1]} : vector<16x256xf32> to vector<1x256xf32>
    %16 = vector.broadcast %15 : vector<1x256xf32> to vector<16x256xf32>
    %17 = arith.mulf %14, %16 : vector<16x256xf32>
    %18 = arith.truncf %17 : vector<16x256xf32> to vector<16x256xbf16>
    %c6_i32 = arith.constant 6 : i32
    %19 = tpu.dynamic_rotate %1 by %c6_i32 dim 1 : vector<16x256xf32>, i32 -> vector<16x256xf32>
    %20 = vector.extract_strided_slice %3 {offsets = [3, 0], sizes = [1, 256], strides = [1, 1]} : vector<16x256xf32> to vector<1x256xf32>
    %21 = vector.broadcast %20 : vector<1x256xf32> to vector<16x256xf32>
    %22 = arith.mulf %19, %21 : vector<16x256xf32>
    %23 = arith.truncf %22 : vector<16x256xf32> to vector<16x256xbf16>
    %c250_i32 = arith.constant 250 : i32
    %24 = tpu.dynamic_rotate %1 by %c250_i32 dim 1 : vector<16x256xf32>, i32 -> vector<16x256xf32>
    %25 = vector.extract_strided_slice %3 {offsets = [4, 0], sizes = [1, 256], strides = [1, 1]} : vector<16x256xf32> to vector<1x256xf32>
    %26 = vector.broadcast %25 : vector<1x256xf32> to vector<16x256xf32>
    %27 = arith.mulf %24, %26 : vector<16x256xf32>
    %28 = arith.truncf %27 : vector<16x256xf32> to vector<16x256xbf16>
    %c166_i32 = arith.constant 166 : i32
    %29 = tpu.dynamic_rotate %1 by %c166_i32 dim 1 : vector<16x256xf32>, i32 -> vector<16x256xf32>
    %30 = vector.extract_strided_slice %3 {offsets = [5, 0], sizes = [1, 256], strides = [1, 1]} : vector<16x256xf32> to vector<1x256xf32>
    %31 = vector.broadcast %30 : vector<1x256xf32> to vector<16x256xf32>
    %32 = arith.mulf %29, %31 : vector<16x256xf32>
    %33 = arith.truncf %32 : vector<16x256xf32> to vector<16x256xbf16>
    %c160_i32 = arith.constant 160 : i32
    %34 = tpu.dynamic_rotate %1 by %c160_i32 dim 1 : vector<16x256xf32>, i32 -> vector<16x256xf32>
    %35 = vector.extract_strided_slice %3 {offsets = [6, 0], sizes = [1, 256], strides = [1, 1]} : vector<16x256xf32> to vector<1x256xf32>
    %36 = vector.broadcast %35 : vector<1x256xf32> to vector<16x256xf32>
    %37 = arith.mulf %34, %36 : vector<16x256xf32>
    %38 = arith.truncf %37 : vector<16x256xf32> to vector<16x256xbf16>
    %c154_i32 = arith.constant 154 : i32
    %39 = tpu.dynamic_rotate %1 by %c154_i32 dim 1 : vector<16x256xf32>, i32 -> vector<16x256xf32>
    %40 = vector.extract_strided_slice %3 {offsets = [7, 0], sizes = [1, 256], strides = [1, 1]} : vector<16x256xf32> to vector<1x256xf32>
    %41 = vector.broadcast %40 : vector<1x256xf32> to vector<16x256xf32>
    %42 = arith.mulf %39, %41 : vector<16x256xf32>
    %43 = arith.truncf %42 : vector<16x256xf32> to vector<16x256xbf16>
    %c204_i32 = arith.constant 204 : i32
    %44 = tpu.dynamic_rotate %1 by %c204_i32 dim 1 : vector<16x256xf32>, i32 -> vector<16x256xf32>
    %45 = vector.extract_strided_slice %3 {offsets = [8, 0], sizes = [1, 256], strides = [1, 1]} : vector<16x256xf32> to vector<1x256xf32>
    %46 = vector.broadcast %45 : vector<1x256xf32> to vector<16x256xf32>
    %47 = arith.mulf %44, %46 : vector<16x256xf32>
    %48 = arith.truncf %47 : vector<16x256xf32> to vector<16x256xbf16>
    %c192_i32 = arith.constant 192 : i32
    %49 = tpu.dynamic_rotate %1 by %c192_i32 dim 1 : vector<16x256xf32>, i32 -> vector<16x256xf32>
    %50 = vector.extract_strided_slice %3 {offsets = [9, 0], sizes = [1, 256], strides = [1, 1]} : vector<16x256xf32> to vector<1x256xf32>
    %51 = vector.broadcast %50 : vector<1x256xf32> to vector<16x256xf32>
    %52 = arith.mulf %49, %51 : vector<16x256xf32>
    %53 = arith.truncf %52 : vector<16x256xf32> to vector<16x256xbf16>
    %c180_i32 = arith.constant 180 : i32
    %54 = tpu.dynamic_rotate %1 by %c180_i32 dim 1 : vector<16x256xf32>, i32 -> vector<16x256xf32>
    %55 = vector.extract_strided_slice %3 {offsets = [10, 0], sizes = [1, 256], strides = [1, 1]} : vector<16x256xf32> to vector<1x256xf32>
    %56 = vector.broadcast %55 : vector<1x256xf32> to vector<16x256xf32>
    %57 = arith.mulf %54, %56 : vector<16x256xf32>
    %58 = arith.truncf %57 : vector<16x256xf32> to vector<16x256xbf16>
    %c12_i32 = arith.constant 12 : i32
    %59 = tpu.dynamic_rotate %1 by %c12_i32 dim 1 : vector<16x256xf32>, i32 -> vector<16x256xf32>
    %60 = vector.extract_strided_slice %3 {offsets = [11, 0], sizes = [1, 256], strides = [1, 1]} : vector<16x256xf32> to vector<1x256xf32>
    %61 = vector.broadcast %60 : vector<1x256xf32> to vector<16x256xf32>
    %62 = arith.mulf %59, %61 : vector<16x256xf32>
    %63 = arith.truncf %62 : vector<16x256xf32> to vector<16x256xbf16>
    %c244_i32 = arith.constant 244 : i32
    %64 = tpu.dynamic_rotate %1 by %c244_i32 dim 1 : vector<16x256xf32>, i32 -> vector<16x256xf32>
    %65 = vector.extract_strided_slice %3 {offsets = [12, 0], sizes = [1, 256], strides = [1, 1]} : vector<16x256xf32> to vector<1x256xf32>
    %66 = vector.broadcast %65 : vector<1x256xf32> to vector<16x256xf32>
    %67 = arith.mulf %64, %66 : vector<16x256xf32>
    %68 = arith.truncf %67 : vector<16x256xf32> to vector<16x256xbf16>
    %c76_i32 = arith.constant 76 : i32
    %69 = tpu.dynamic_rotate %1 by %c76_i32 dim 1 : vector<16x256xf32>, i32 -> vector<16x256xf32>
    %70 = vector.extract_strided_slice %3 {offsets = [13, 0], sizes = [1, 256], strides = [1, 1]} : vector<16x256xf32> to vector<1x256xf32>
    %71 = vector.broadcast %70 : vector<1x256xf32> to vector<16x256xf32>
    %72 = arith.mulf %69, %71 : vector<16x256xf32>
    %73 = arith.truncf %72 : vector<16x256xf32> to vector<16x256xbf16>
    %c64_i32 = arith.constant 64 : i32
    %74 = tpu.dynamic_rotate %1 by %c64_i32 dim 1 : vector<16x256xf32>, i32 -> vector<16x256xf32>
    %75 = vector.extract_strided_slice %3 {offsets = [14, 0], sizes = [1, 256], strides = [1, 1]} : vector<16x256xf32> to vector<1x256xf32>
    %76 = vector.broadcast %75 : vector<1x256xf32> to vector<16x256xf32>
    %77 = arith.mulf %74, %76 : vector<16x256xf32>
    %78 = arith.truncf %77 : vector<16x256xf32> to vector<16x256xbf16>
    %c52_i32 = arith.constant 52 : i32
    %79 = tpu.dynamic_rotate %1 by %c52_i32 dim 1 : vector<16x256xf32>, i32 -> vector<16x256xf32>
    %80 = vector.extract_strided_slice %3 {offsets = [15, 0], sizes = [1, 256], strides = [1, 1]} : vector<16x256xf32> to vector<1x256xf32>
    %81 = vector.broadcast %80 : vector<1x256xf32> to vector<16x256xf32>
    %82 = arith.mulf %79, %81 : vector<16x256xf32>
    %83 = arith.truncf %82 : vector<16x256xf32> to vector<16x256xbf16>
    %84 = tpu.concatenate %2, %8, %13, %18, %23, %28, %33, %38, %43, %48, %53, %58, %63, %68, %73, %78 in 0 : vector<16x256xbf16>, vector<16x256xbf16>, vector<16x256xbf16>, vector<16x256xbf16>, vector<16x256xbf16>, vector<16x256xbf16>, vector<16x256xbf16>, vector<16x256xbf16>, vector<16x256xbf16>, vector<16x256xbf16>, vector<16x256xbf16>, vector<16x256xbf16>, vector<16x256xbf16>, vector<16x256xbf16>, vector<16x256xbf16>, vector<16x256xbf16> -> vector<256x256xbf16>
    %85 = tpu.concatenate %84, %83 in 0 : vector<256x256xbf16>, vector<16x256xbf16> -> vector<272x256xbf16>
    %c0_4 = arith.constant 0 : index
    %c0_5 = arith.constant 0 : index
    %86 = vector.load %arg2[%c0_4, %c0_5] : memref<40x272xbf16, #tpu.memory_space<vmem>>, vector<40x272xbf16>
    %cst = arith.constant dense<0.000000e+00> : vector<40x256xf32>
    %87 = tpu.matmul %86, %85, %cst {dimension_numbers = #tpu.dot_dimension_numbers<[1], [0], [0], [1], [0, 0, 1, 1], [], []>} : vector<40x272xbf16>, vector<272x256xbf16>, vector<40x256xf32> -> vector<40x256xf32>
    %c0_6 = arith.constant 0 : index
    %c0_7 = arith.constant 0 : index
    %c0_8 = arith.constant 0 : index
    %88 = vector.load %arg4[%c0_6, %c0_7, %c0_8] : memref<1x40x256xf32, #tpu.memory_space<vmem>>, vector<1x40x256xf32>
    %89 = vector.shape_cast %88 : vector<1x40x256xf32> to vector<40x256xf32>
    %90 = vector.shape_cast %87 : vector<40x256xf32> to vector<1x40x256xf32>
    tpu.vector_store %arg4[%c0_6, %c0_7, %c0_8], %90 {strides = array<i32>} : memref<1x40x256xf32, #tpu.memory_space<vmem>>, vector<1x40x256xf32>,
    return
  }
  func.func @transform_0(%arg0: i32) -> (i32, i32, i32) {
    %c0_i32 = arith.constant 0 : i32
    %c0_i32_0 = arith.constant 0 : i32
    %c0_i32_1 = arith.constant 0 : i32
    return %arg0, %c0_i32, %c0_i32_0 : i32, i32, i32
  }
  func.func @transform_1(%arg0: i32) -> (i32, i32) {
    %c0_i32 = arith.constant 0 : i32
    %c0_i32_0 = arith.constant 0 : i32
    %c0_i32_1 = arith.constant 0 : i32
    return %c0_i32, %c0_i32_0 : i32, i32
  }
  func.func @transform_2(%arg0: i32) -> (i32, i32) {
    %c0_i32 = arith.constant 0 : i32
    %c0_i32_0 = arith.constant 0 : i32
    %c0_i32_1 = arith.constant 0 : i32
    return %c0_i32, %c0_i32_0 : i32, i32
  }
  func.func @transform_3(%arg0: i32) -> (i32, i32, i32) {
    %c0_i32 = arith.constant 0 : i32
    %c0_i32_0 = arith.constant 0 : i32
    %c0_i32_1 = arith.constant 0 : i32
    return %arg0, %c0_i32, %c0_i32_0 : i32, i32, i32
  }
}

module attributes {stable_mosaic.version = 11 : i64} {
  func.func @out_conv_kernel(%arg0: i32, %arg1: memref<1x40x256xf32, #tpu.memory_space<vmem>>, %arg2: memref<1x8x1xf32, #tpu.memory_space<vmem>>, %arg3: memref<40x1xf32, #tpu.memory_space<vmem>>, %arg4: memref<40x1xf32, #tpu.memory_space<vmem>>, %arg5: memref<8x40xbf16, #tpu.memory_space<vmem>>, %arg6: memref<1x8x256xf32, #tpu.memory_space<vmem>>) attributes {dimension_semantics = [#tpu.dimension_semantics<parallel>], iteration_bounds = array<i64: 2>, scalar_prefetch = 0 : i64, scratch_operands = 0 : i64, tpu.core_type = #tpu.core_type<tc>, window_params = [{transform_indices = @transform_0, window_bounds = array<i64: 1, 40, 256>}, {transform_indices = @transform_1, window_bounds = array<i64: 1, 8, 1>}, {pipeline_mode = #tpu.pipeline_mode<synchronous>, transform_indices = @transform_2, window_bounds = array<i64: 40, 1>}, {pipeline_mode = #tpu.pipeline_mode<synchronous>, transform_indices = @transform_3, window_bounds = array<i64: 40, 1>}, {pipeline_mode = #tpu.pipeline_mode<synchronous>, transform_indices = @transform_4, window_bounds = array<i64: 8, 40>}, {transform_indices = @transform_5, window_bounds = array<i64: 1, 8, 256>}]} {
    %c0 = arith.constant 0 : index
    %c0_0 = arith.constant 0 : index
    %c0_1 = arith.constant 0 : index
    %0 = vector.load %arg1[%c0, %c0_0, %c0_1] : memref<1x40x256xf32, #tpu.memory_space<vmem>>, vector<1x40x256xf32>
    %1 = vector.shape_cast %0 : vector<1x40x256xf32> to vector<40x256xf32>
    %c0_2 = arith.constant 0 : index
    %c0_3 = arith.constant 0 : index
    %2 = vector.load %arg3[%c0_2, %c0_3] : memref<40x1xf32, #tpu.memory_space<vmem>>, vector<40x1xf32>
    %3 = vector.broadcast %2 : vector<40x1xf32> to vector<40x256xf32>
    %4 = arith.mulf %1, %3 : vector<40x256xf32>
    %c0_4 = arith.constant 0 : index
    %c0_5 = arith.constant 0 : index
    %5 = vector.load %arg4[%c0_4, %c0_5] : memref<40x1xf32, #tpu.memory_space<vmem>>, vector<40x1xf32>
    %6 = vector.broadcast %5 : vector<40x1xf32> to vector<40x256xf32>
    %7 = arith.addf %4, %6 : vector<40x256xf32>
    %cst = arith.constant 0.000000e+00 : f32
    %8 = vector.broadcast %cst : f32 to vector<40x256xf32>
    %9 = arith.maximumf %7, %8 : vector<40x256xf32>
    %c0_6 = arith.constant 0 : index
    %c0_7 = arith.constant 0 : index
    %10 = vector.load %arg5[%c0_6, %c0_7] : memref<8x40xbf16, #tpu.memory_space<vmem>>, vector<8x40xbf16>
    %11 = arith.truncf %9 : vector<40x256xf32> to vector<40x256xbf16>
    %cst_8 = arith.constant dense<0.000000e+00> : vector<8x256xf32>
    %12 = tpu.matmul %10, %11, %cst_8 {dimension_numbers = #tpu.dot_dimension_numbers<[1], [0], [0], [1], [0, 0, 1, 1], [], []>} : vector<8x40xbf16>, vector<40x256xbf16>, vector<8x256xf32> -> vector<8x256xf32>
    %c0_9 = arith.constant 0 : index
    %c0_10 = arith.constant 0 : index
    %c0_11 = arith.constant 0 : index
    %13 = vector.load %arg2[%c0_9, %c0_10, %c0_11] : memref<1x8x1xf32, #tpu.memory_space<vmem>>, vector<1x8x1xf32>
    %14 = vector.shape_cast %13 : vector<1x8x1xf32> to vector<8x1xf32>
    %15 = vector.broadcast %14 : vector<8x1xf32> to vector<8x256xf32>
    %16 = arith.addf %12, %15 : vector<8x256xf32>
    %c0_12 = arith.constant 0 : index
    %c0_13 = arith.constant 0 : index
    %c0_14 = arith.constant 0 : index
    %17 = vector.load %arg6[%c0_12, %c0_13, %c0_14] : memref<1x8x256xf32, #tpu.memory_space<vmem>>, vector<1x8x256xf32>
    %18 = vector.shape_cast %17 : vector<1x8x256xf32> to vector<8x256xf32>
    %19 = vector.shape_cast %16 : vector<8x256xf32> to vector<1x8x256xf32>
    tpu.vector_store %arg6[%c0_12, %c0_13, %c0_14], %19 {strides = array<i32>} : memref<1x8x256xf32, #tpu.memory_space<vmem>>, vector<1x8x256xf32>,
    return
  }
  func.func @transform_0(%arg0: i32) -> (i32, i32, i32) {
    %c0_i32 = arith.constant 0 : i32
    %c0_i32_0 = arith.constant 0 : i32
    %c0_i32_1 = arith.constant 0 : i32
    return %arg0, %c0_i32, %c0_i32_0 : i32, i32, i32
  }
  func.func @transform_1(%arg0: i32) -> (i32, i32, i32) {
    %c0_i32 = arith.constant 0 : i32
    %c0_i32_0 = arith.constant 0 : i32
    %c0_i32_1 = arith.constant 0 : i32
    return %arg0, %c0_i32, %c0_i32_0 : i32, i32, i32
  }
  func.func @transform_2(%arg0: i32) -> (i32, i32) {
    %c0_i32 = arith.constant 0 : i32
    %c0_i32_0 = arith.constant 0 : i32
    %c0_i32_1 = arith.constant 0 : i32
    return %c0_i32, %c0_i32_0 : i32, i32
  }
  func.func @transform_3(%arg0: i32) -> (i32, i32) {
    %c0_i32 = arith.constant 0 : i32
    %c0_i32_0 = arith.constant 0 : i32
    %c0_i32_1 = arith.constant 0 : i32
    return %c0_i32, %c0_i32_0 : i32, i32
  }
  func.func @transform_4(%arg0: i32) -> (i32, i32) {
    %c0_i32 = arith.constant 0 : i32
    %c0_i32_0 = arith.constant 0 : i32
    %c0_i32_1 = arith.constant 0 : i32
    return %c0_i32, %c0_i32_0 : i32, i32
  }
  func.func @transform_5(%arg0: i32) -> (i32, i32, i32) {
    %c0_i32 = arith.constant 0 : i32
    %c0_i32_0 = arith.constant 0 : i32
    %c0_i32_1 = arith.constant 0 : i32
    return %arg0, %c0_i32, %c0_i32_0 : i32, i32, i32
  }
}

</mosaic_0001>

<llo_original>
// kernel: aspp_center_block.2
$region0: #{aspp_center_block.2}
  #allocation0 [shape = 'u32[]', space=smem, size = 0x4, offset = 0x4, fixed_abs, tag = 'smem constant byte address 0x4 - core index']
  #allocation1 [shape = 'u32[144,128]{1,0:T(1,128)}', space=vmem, size = 0x12000, scoped, tag = 'internal scratch']
  %s0 = inlined_call_operand.vmem [shape: f32[2,16,256], index: 0, kind: input, shape index: {}]
  %s1 = inlined_call_operand.vmem [shape: bf16[40,272], index: 1, kind: input, shape index: {}]
  %s2 = inlined_call_operand.vmem [shape: f32[16,256], index: 2, kind: input, shape index: {}]
  %s3 = inlined_call_operand.vmem [shape: f32[2,40,256], index: 3, kind: output, shape index: {}]
  %s4 = sld [smem:[#allocation0]]
  $region45: #{aspp_center_block.2} parent=0
    _
  %s6 = ssub.s32 1, %s4
  %s7 = scalar_select 0, %s6, %s4
  loop: start=0, step=1, limit=4
  $region2: #{aspp_center_block.2} parent=0 // loop_pre_header
    _
  $region3: #{aspp_center_block.2} parent=0 // loop_header
    %s9 = sphi 0, %s13
    %p10 = scmp.ge.s32.totalorder %s9, 4
    %s19 = sphi 0, %s21
    %s22 = sphi 0, %s19
    %s23 = sphi 0, %s22
    %s39 = sphi 0, %s23
    %s43 = sphi 0, %s43
    %s45 = sphi 0, %s43
    %s46 = sphi 0, %s45
    %s60 = sphi 0, %s46
    %s64 = sphi 0, %s64
    %s66 = sphi 0, %s64
    %s67 = sphi 0, %s66
    %s81 = sphi 0, %s67
    %s87 = sphi 0, %s89
    %s90 = sphi 0, %s87
    %s91 = sphi 0, %s90
    %s107 = sphi 0, %s91
  $region4: #{aspp_center_block.2} parent=0 // loop_header_branch
    %12 = sbr.rel (%p10) target = $region8
  $region5: #{aspp_center_block.2} parent=0 // loop_body
    %s14 = ssub.s32 %s9, 1
    %s15 = ssub.s32 %s9, 2
    %s16 = sadd.s32 %s9, 1
    %s17 = ssub.s32 %s9, %s16
    %p18 = scmp.eq.s32.totalorder %s17, 0
    %s20 = sadd.s32 %s19, 1
    %s21 = scalar_select %p18, %s19, %s20
    %p24 = pneg %p18
    %p25 = scmp.eq.s32.totalorder %s9, 1
    %p26 = por %p24, %p25
    %p27 = scmp.ne.s32.totalorder %s19, %s22
    %p28 = scmp.eq.s32.totalorder %s9, 0
    %p29 = por %p27, %p28
    %p30 = scmp.ne.s32.totalorder %s19, %s22
    %p31 = scmp.eq.s32.totalorder %s14, 1
    %p32 = por %p30, %p31
    %p33 = scmp.ne.s32.totalorder %s22, %s23
    %p34 = scmp.eq.s32.totalorder %s14, 0
    %p35 = por %p33, %p34
    %p36 = scmp.ne.s32.totalorder %s22, %s23
    %p37 = scmp.eq.s32.totalorder %s15, 1
    %p38 = por %p36, %p37
    %p40 = scmp.ne.s32.totalorder %s23, %s39
    %p41 = scmp.eq.s32.totalorder %s15, 0
    %p42 = por %p40, %p41
    %s44 = sadd.s32 %s43, 1
    %p47 = scmp.eq.s32.totalorder %s9, 1
    %p48 = scmp.ne.s32.totalorder %s43, %s45
    %p49 = scmp.eq.s32.totalorder %s9, 0
    %p50 = por %p48, %p49
    %p51 = scmp.ne.s32.totalorder %s43, %s45
    %p52 = scmp.eq.s32.totalorder %s14, 1
    %p53 = por %p51, %p52
    %p54 = scmp.ne.s32.totalorder %s45, %s46
    %p55 = scmp.eq.s32.totalorder %s14, 0
    %p56 = por %p54, %p55
    %p57 = scmp.ne.s32.totalorder %s45, %s46
    %p58 = scmp.eq.s32.totalorder %s15, 1
    %p59 = por %p57, %p58
    %p61 = scmp.ne.s32.totalorder %s46, %s60
    %p62 = scmp.eq.s32.totalorder %s15, 0
    %p63 = por %p61, %p62
    %s65 = sadd.s32 %s64, 1
    %p68 = scmp.eq.s32.totalorder %s9, 1
    %p69 = scmp.ne.s32.totalorder %s64, %s66
    %p70 = scmp.eq.s32.totalorder %s9, 0
    %p71 = por %p69, %p70
    %p72 = scmp.ne.s32.totalorder %s64, %s66
    %p73 = scmp.eq.s32.totalorder %s14, 1
    %p74 = por %p72, %p73
    %p75 = scmp.ne.s32.totalorder %s66, %s67
    %p76 = scmp.eq.s32.totalorder %s14, 0
    %p77 = por %p75, %p76
    %p78 = scmp.ne.s32.totalorder %s66, %s67
    %p79 = scmp.eq.s32.totalorder %s15, 1
    %p80 = por %p78, %p79
    %p82 = scmp.ne.s32.totalorder %s67, %s81
    %p83 = scmp.eq.s32.totalorder %s15, 0
    %p84 = por %p82, %p83
    %s85 = ssub.s32 %s9, %s16
    %p86 = scmp.eq.s32.totalorder %s85, 0
    %s88 = sadd.s32 %s87, 1
    %s89 = scalar_select %p86, %s87, %s88
    %p92 = pneg %p86
    %p93 = scmp.eq.s32.totalorder %s9, 1
    %p94 = por %p92, %p93
    %p95 = scmp.ne.s32.totalorder %s87, %s90
    %p96 = scmp.eq.s32.totalorder %s9, 0
    %p97 = por %p95, %p96
    %p98 = scmp.ne.s32.totalorder %s87, %s90
    %p99 = scmp.eq.s32.totalorder %s14, 1
    %p100 = por %p98, %p99
    %p101 = scmp.ne.s32.totalorder %s90, %s91
    %p102 = scmp.eq.s32.totalorder %s14, 0
    %p103 = por %p101, %p102
    %p104 = scmp.ne.s32.totalorder %s90, %s91
    %p105 = scmp.eq.s32.totalorder %s15, 1
    %p106 = por %p104, %p105
    %p108 = scmp.ne.s32.totalorder %s91, %s107
    %p109 = scmp.eq.s32.totalorder %s15, 0
    %p110 = por %p108, %p109
    %p111 = scmp.le.s32.totalorder 1, %s9
    %p112 = scmp.lt.s32.totalorder %s9, 3
    %p113 = pnand %p111, %p112
    %p114 = pneg %p113
    // Predicated region
    $region9: #{aspp_center_block.2} parent=5 // pred_check
      _
    $region10: #{aspp_center_block.2} parent=5 // pred_check_branch
      %116 = sbr.rel (%p113) target = $region12
    $region11: #{aspp_center_block.2} parent=5 // pred_region
      %s117 = ssub.s32 %s9, 1
      // Predicated region
      $region13: #{aspp_center_block.2} parent=11 // pred_check
        %p118 = pneg %p56
      $region14: #{aspp_center_block.2} parent=11 // pred_check_branch
        %120 = sbr.rel (%p118) target = $region16
      $region15: #{aspp_center_block.2} parent=11 // pred_region
        _
      $region16: #{aspp_center_block.2} parent=11 // pred_fallthru
        _
      // Predicated region
      $region17: #{aspp_center_block.2} parent=11 // pred_check
        %p121 = pneg %p77
      $region18: #{aspp_center_block.2} parent=11 // pred_check_branch
        %123 = sbr.rel (%p121) target = $region20
      $region19: #{aspp_center_block.2} parent=11 // pred_region
        _
      $region20: #{aspp_center_block.2} parent=11 // pred_fallthru
        _
    $region12: #{aspp_center_block.2} parent=5 // pred_fallthru
      _
    %p124 = scmp.lt.s32.totalorder %s9, 2
    // Predicated region
    $region21: #{aspp_center_block.2} parent=5 // pred_check
      %p125 = pneg %p124
    $region22: #{aspp_center_block.2} parent=5 // pred_check_branch
      %127 = sbr.rel (%p125) target = $region24
    $region23: #{aspp_center_block.2} parent=5 // pred_region
      // Predicated region
      $region25: #{aspp_center_block.2} parent=23 // pred_check
        %p128 = pneg %p29
      $region26: #{aspp_center_block.2} parent=23 // pred_check_branch
        %130 = sbr.rel (%p128) target = $region28
      $region27: #{aspp_center_block.2} parent=23 // pred_region
        %p131 = scmp.lt.s32.totalorder %s9, 1
        %s132 = scalar_select %p131, %s9, 1
        %s133 = smul.addr %s132, 4
        %s134 = smul.addr %s133, 8
        %s135 = scalar_lea.vmem %s0, %s134
      $region28: #{aspp_center_block.2} parent=23 // pred_fallthru
        _
    $region24: #{aspp_center_block.2} parent=5 // pred_fallthru
      _
    %p136 = scmp.le.s32.totalorder 1, %s9
    %p137 = scmp.lt.s32.totalorder %s9, 3
    %p138 = pnand %p136, %p137
    %p139 = pneg %p138
    // Predicated region
    $region29: #{aspp_center_block.2} parent=5 // pred_check
      _
    $region30: #{aspp_center_block.2} parent=5 // pred_check_branch
      %141 = sbr.rel (%p138) target = $region32
    $region31: #{aspp_center_block.2} parent=5 // pred_region
      %s142 = ssub.s32 %s9, 1
      %p143 = scmp.lt.s32.totalorder %s14, 1
      %s144 = scalar_select %p143, %s14, 1
      %s145 = smul.addr %s144, 4
      %s146 = smul.addr %s145, 8
      %s147 = scalar_lea.vmem %s0, %s146
      %p148 = pneg %p35
      %p149 = pneg %p32
      %p150 = pneg %p56
      %p151 = pneg %p53
      %p152 = pneg %p77
      %p153 = pneg %p74
      %p154 = pneg %p103
      %p155 = pneg %p100
      %p156 = scmp.lt.s32.totalorder %s14, 1
      %s157 = scalar_select %p156, %s14, 1
      %s158 = smul.addr %s157, 10
      %s159 = smul.addr %s158, 8
      %s160 = scalar_lea.vmem %s3, %s159
      %p161 = scmp.lt.s32.totalorder %s14, 1
      %s162 = scalar_select %p161, %s14, 1
      %s163 = smul.addr %s162, 4
      %s164 = smul.addr %s163, 8
      %s165 = scalar_lea.vmem %s0, %s164
      %p166 = scmp.lt.s32.totalorder %s14, 1
      %s167 = scalar_select %p166, %s14, 1
      %s168 = smul.addr %s167, 10
      %s169 = smul.addr %s168, 8
      %s170 = scalar_lea.vmem %s3, %s169
      %v172 = vld [vmem:[%s165] sm:$0xff]
      %v173 = vld [vmem:[%s165 + $0x8] sm:$0xff]
      %v174 = vld [vmem:[%s165 + $0x10] sm:$0xff]
      %v175 = vld [vmem:[%s165 + $0x18] sm:$0xff]
      %v176 = vpack.c.bf16 %v174, %v172
      %v177 = vpack.c.bf16 %v175, %v173
      %v178 = vld [vmem:[%s2] sm:$0xff]
      %v179 = vld [vmem:[%s2 + $0x8] sm:$0xff]
      %v180 = vld [vmem:[%s2 + $0x10] sm:$0xff]
      %v181 = vld [vmem:[%s2 + $0x18] sm:$0xff]
      %182 = vrot.lane.b32.xlu0 %v172, 102
      %v183 = vpop.permute.xlu0 %182
      %184 = vrot.lane.b32.xlu0 %v174, 102
      %v185 = vpop.permute.xlu0 %184
      %186 = vrot.lane.b32.xlu0 %v173, 102
      %v187 = vpop.permute.xlu0 %186
      %188 = vrot.lane.b32.xlu0 %v175, 102
      %v189 = vpop.permute.xlu0 %188
      %v190 = vlaneseq
      %v191 = vand.u32 %v190, 127
      %vm192 = vcmp.lt.s32.totalorder %v191, 102
      %v193 = vsel %vm192, %v183, %v187
      %v194 = vsel %vm192, %v185, %v189
      %v195 = vsel %vm192, %v187, %v183
      %v196 = vsel %vm192, %v189, %v185
      %v197 = vlaneseq
      %v198 = vshrl.u32 %v197, 7
      %v199 = vsub.s32 0, %v198
      %v200 = vrot.slane %v178, %v199
      %v201 = vlaneseq
      %v202 = vshrl.u32 %v201, 7
      %v203 = vsub.s32 0, %v202
      %v204 = vrot.slane %v179, %v203
      %v205 = vmul.f32 %v195, %v200
      %v206 = vmul.f32 %v193, %v204
      %v207 = vmul.f32 %v196, %v200
      %v208 = vmul.f32 %v194, %v204
      %v209 = vpack.c.bf16 %v207, %v205
      %v210 = vpack.c.bf16 %v208, %v206
      %211 = vrot.lane.b32.xlu0 %v172, 96
      %v212 = vpop.permute.xlu0 %211
      %213 = vrot.lane.b32.xlu0 %v174, 96
      %v214 = vpop.permute.xlu0 %213
      %215 = vrot.lane.b32.xlu0 %v173, 96
      %v216 = vpop.permute.xlu0 %215
      %217 = vrot.lane.b32.xlu0 %v175, 96
      %v218 = vpop.permute.xlu0 %217
      %vm219 = vcmp.lt.s32.totalorder %v191, 96
      %v220 = vsel %vm219, %v212, %v216
      %v221 = vsel %vm219, %v214, %v218
      %v222 = vsel %vm219, %v216, %v212
      %v223 = vsel %vm219, %v218, %v214
      %v224 = vlaneseq
      %v225 = vshrl.u32 %v224, 7
      %v226 = vsub.s32 1, %v225
      %v227 = vrot.slane %v178, %v226
      %v228 = vlaneseq
      %v229 = vshrl.u32 %v228, 7
      %v230 = vsub.s32 1, %v229
      %v231 = vrot.slane %v179, %v230
      %v232 = vmul.f32 %v222, %v227
      %v233 = vmul.f32 %v220, %v231
      %v234 = vmul.f32 %v223, %v227
      %v235 = vmul.f32 %v221, %v231
      %v236 = vpack.c.bf16 %v234, %v232
      %v237 = vpack.c.bf16 %v235, %v233
      %238 = vrot.lane.b32.xlu0 %v172, 90
      %v239 = vpop.permute.xlu0 %238
      %240 = vrot.lane.b32.xlu0 %v174, 90
      %v241 = vpop.permute.xlu0 %240
      %242 = vrot.lane.b32.xlu0 %v173, 90
      %v243 = vpop.permute.xlu0 %242
      %244 = vrot.lane.b32.xlu0 %v175, 90
      %v245 = vpop.permute.xlu0 %244
      %vm246 = vcmp.lt.s32.totalorder %v191, 90
      %v247 = vsel %vm246, %v239, %v243
      %v248 = vsel %vm246, %v241, %v245
      %v249 = vsel %vm246, %v243, %v239
      %v250 = vsel %vm246, %v245, %v241
      %v251 = vlaneseq
      %v252 = vshrl.u32 %v251, 7
      %v253 = vsub.s32 2, %v252
      %v254 = vrot.slane %v178, %v253
      %v255 = vlaneseq
      %v256 = vshrl.u32 %v255, 7
      %v257 = vsub.s32 2, %v256
      %v258 = vrot.slane %v179, %v257
      %v259 = vmul.f32 %v249, %v254
      %v260 = vmul.f32 %v247, %v258
      %v261 = vmul.f32 %v250, %v254
      %v262 = vmul.f32 %v248, %v258
      %v263 = vpack.c.bf16 %v261, %v259
      %v264 = vpack.c.bf16 %v262, %v260
      %265 = vrot.lane.b32.xlu0 %v172, 6
      %v266 = vpop.permute.xlu0 %265
      %267 = vrot.lane.b32.xlu0 %v174, 6
      %v268 = vpop.permute.xlu0 %267
      %269 = vrot.lane.b32.xlu0 %v173, 6
      %v270 = vpop.permute.xlu0 %269
      %271 = vrot.lane.b32.xlu0 %v175, 6
      %v272 = vpop.permute.xlu0 %271
      %vm273 = vcmp.lt.s32.totalorder %v191, 6
      %v274 = vsel %vm273, %v266, %v270
      %v275 = vsel %vm273, %v268, %v272
      %v276 = vsel %vm273, %v270, %v266
      %v277 = vsel %vm273, %v272, %v268
      %v278 = vlaneseq
      %v279 = vshrl.u32 %v278, 7
      %v280 = vsub.s32 3, %v279
      %v281 = vrot.slane %v178, %v280
      %v282 = vlaneseq
      %v283 = vshrl.u32 %v282, 7
      %v284 = vsub.s32 3, %v283
      %v285 = vrot.slane %v179, %v284
      %v286 = vmul.f32 %v276, %v281
      %v287 = vmul.f32 %v274, %v285
      %v288 = vmul.f32 %v277, %v281
      %v289 = vmul.f32 %v275, %v285
      %v290 = vpack.c.bf16 %v288, %v286
      %v291 = vpack.c.bf16 %v289, %v287
      %292 = vrot.lane.b32.xlu0 %v172, 122
      %v293 = vpop.permute.xlu0 %292
      %294 = vrot.lane.b32.xlu0 %v174, 122
      %v295 = vpop.permute.xlu0 %294
      %296 = vrot.lane.b32.xlu0 %v173, 122
      %v297 = vpop.permute.xlu0 %296
      %298 = vrot.lane.b32.xlu0 %v175, 122
      %v299 = vpop.permute.xlu0 %298
      %vm300 = vcmp.lt.s32.totalorder %v191, 122
      %v301 = vsel %vm300, %v293, %v297
      %v302 = vsel %vm300, %v295, %v299
      %v303 = vsel %vm300, %v297, %v293
      %v304 = vsel %vm300, %v299, %v295
      %v305 = vlaneseq
      %v306 = vshrl.u32 %v305, 7
      %v307 = vsub.s32 4, %v306
      %v308 = vrot.slane %v178, %v307
      %v309 = vlaneseq
      %v310 = vshrl.u32 %v309, 7
      %v311 = vsub.s32 4, %v310
      %v312 = vrot.slane %v179, %v311
      %v313 = vmul.f32 %v301, %v308
      %v314 = vmul.f32 %v303, %v312
      %v315 = vmul.f32 %v302, %v308
      %v316 = vmul.f32 %v304, %v312
      %v317 = vpack.c.bf16 %v315, %v313
      %v318 = vpack.c.bf16 %v316, %v314
      %319 = vrot.lane.b32.xlu0 %v172, 38
      %v320 = vpop.permute.xlu0 %319
      %321 = vrot.lane.b32.xlu0 %v174, 38
      %v322 = vpop.permute.xlu0 %321
      %323 = vrot.lane.b32.xlu0 %v173, 38
      %v324 = vpop.permute.xlu0 %323
      %325 = vrot.lane.b32.xlu0 %v175, 38
      %v326 = vpop.permute.xlu0 %325
      %vm327 = vcmp.lt.s32.totalorder %v191, 38
      %v328 = vsel %vm327, %v320, %v324
      %v329 = vsel %vm327, %v322, %v326
      %v330 = vsel %vm327, %v324, %v320
      %v331 = vsel %vm327, %v326, %v322
      %v332 = vlaneseq
      %v333 = vshrl.u32 %v332, 7
      %v334 = vsub.s32 5, %v333
      %v335 = vrot.slane %v178, %v334
      %v336 = vlaneseq
      %v337 = vshrl.u32 %v336, 7
      %v338 = vsub.s32 5, %v337
      %v339 = vrot.slane %v179, %v338
      %v340 = vmul.f32 %v328, %v335
      %v341 = vmul.f32 %v330, %v339
      %v342 = vmul.f32 %v329, %v335
      %v343 = vmul.f32 %v331, %v339
      %v344 = vpack.c.bf16 %v342, %v340
      %v345 = vpack.c.bf16 %v343, %v341
      %346 = vrot.lane.b32.xlu0 %v172, 32
      %v347 = vpop.permute.xlu0 %346
      %348 = vrot.lane.b32.xlu0 %v174, 32
      %v349 = vpop.permute.xlu0 %348
      %350 = vrot.lane.b32.xlu0 %v173, 32
      %v351 = vpop.permute.xlu0 %350
      %352 = vrot.lane.b32.xlu0 %v175, 32
      %v353 = vpop.permute.xlu0 %352
      %vm354 = vcmp.lt.s32.totalorder %v191, 32
      %v355 = vsel %vm354, %v347, %v351
      %v356 = vsel %vm354, %v349, %v353
      %v357 = vsel %vm354, %v351, %v347
      %v358 = vsel %vm354, %v353, %v349
      %v359 = vlaneseq
      %v360 = vshrl.u32 %v359, 7
      %v361 = vsub.s32 6, %v360
      %v362 = vrot.slane %v178, %v361
      %v363 = vlaneseq
      %v364 = vshrl.u32 %v363, 7
      %v365 = vsub.s32 6, %v364
      %v366 = vrot.slane %v179, %v365
      %v367 = vmul.f32 %v355, %v362
      %v368 = vmul.f32 %v357, %v366
      %v369 = vmul.f32 %v356, %v362
      %v370 = vmul.f32 %v358, %v366
      %v371 = vpack.c.bf16 %v369, %v367
      %v372 = vpack.c.bf16 %v370, %v368
      %373 = vrot.lane.b32.xlu0 %v172, 26
      %v374 = vpop.permute.xlu0 %373
      %375 = vrot.lane.b32.xlu0 %v174, 26
      %v376 = vpop.permute.xlu0 %375
      %377 = vrot.lane.b32.xlu0 %v173, 26
      %v378 = vpop.permute.xlu0 %377
      %379 = vrot.lane.b32.xlu0 %v175, 26
      %v380 = vpop.permute.xlu0 %379
      %vm381 = vcmp.lt.s32.totalorder %v191, 26
      %v382 = vsel %vm381, %v374, %v378
      %v383 = vsel %vm381, %v376, %v380
      %v384 = vsel %vm381, %v378, %v374
      %v385 = vsel %vm381, %v380, %v376
      %v386 = vlaneseq
      %v387 = vshrl.u32 %v386, 7
      %v388 = vsub.s32 7, %v387
      %v389 = vrot.slane %v178, %v388
      %v390 = vlaneseq
      %v391 = vshrl.u32 %v390, 7
      %v392 = vsub.s32 7, %v391
      %v393 = vrot.slane %v179, %v392
      %v394 = vmul.f32 %v382, %v389
      %v395 = vmul.f32 %v384, %v393
      %v396 = vmul.f32 %v383, %v389
      %v397 = vmul.f32 %v385, %v393
      %v398 = vpack.c.bf16 %v396, %v394
      %v399 = vpack.c.bf16 %v397, %v395
      %400 = vrot.lane.b32.xlu0 %v172, 76
      %v401 = vpop.permute.xlu0 %400
      %402 = vrot.lane.b32.xlu0 %v174, 76
      %v403 = vpop.permute.xlu0 %402
      %404 = vrot.lane.b32.xlu0 %v173, 76
      %v405 = vpop.permute.xlu0 %404
      %406 = vrot.lane.b32.xlu0 %v175, 76
      %v407 = vpop.permute.xlu0 %406
      %vm408 = vcmp.lt.s32.totalorder %v191, 76
      %v409 = vsel %vm408, %v401, %v405
      %v410 = vsel %vm408, %v403, %v407
      %v411 = vsel %vm408, %v405, %v401
      %v412 = vsel %vm408, %v407, %v403
      %v413 = vlaneseq
      %v414 = vshrl.u32 %v413, 7
      %v415 = vsub.s32 0, %v414
      %v416 = vrot.slane %v180, %v415
      %v417 = vlaneseq
      %v418 = vshrl.u32 %v417, 7
      %v419 = vsub.s32 0, %v418
      %v420 = vrot.slane %v181, %v419
      %v421 = vmul.f32 %v409, %v416
      %v422 = vmul.f32 %v411, %v420
      %v423 = vmul.f32 %v410, %v416
      %v424 = vmul.f32 %v412, %v420
      %v425 = vpack.c.bf16 %v423, %v421
      %v426 = vpack.c.bf16 %v424, %v422
      %427 = vrot.lane.b32.xlu0 %v172, 64
      %v428 = vpop.permute.xlu0 %427
      %429 = vrot.lane.b32.xlu0 %v174, 64
      %v430 = vpop.permute.xlu0 %429
      %431 = vrot.lane.b32.xlu0 %v173, 64
      %v432 = vpop.permute.xlu0 %431
      %433 = vrot.lane.b32.xlu0 %v175, 64
      %v434 = vpop.permute.xlu0 %433
      %vm435 = vcmp.lt.s32.totalorder %v191, 64
      %v436 = vsel %vm435, %v428, %v432
      %v437 = vsel %vm435, %v430, %v434
      %v438 = vsel %vm435, %v432, %v428
      %v439 = vsel %vm435, %v434, %v430
      %v440 = vlaneseq
      %v441 = vshrl.u32 %v440, 7
      %v442 = vsub.s32 1, %v441
      %v443 = vrot.slane %v180, %v442
      %v444 = vlaneseq
      %v445 = vshrl.u32 %v444, 7
      %v446 = vsub.s32 1, %v445
      %v447 = vrot.slane %v181, %v446
      %v448 = vmul.f32 %v436, %v443
      %v449 = vmul.f32 %v438, %v447
      %v450 = vmul.f32 %v437, %v443
      %v451 = vmul.f32 %v439, %v447
      %v452 = vpack.c.bf16 %v450, %v448
      %v453 = vpack.c.bf16 %v451, %v449
      %454 = vrot.lane.b32.xlu0 %v172, 52
      %v455 = vpop.permute.xlu0 %454
      %456 = vrot.lane.b32.xlu0 %v174, 52
      %v457 = vpop.permute.xlu0 %456
      %458 = vrot.lane.b32.xlu0 %v173, 52
      %v459 = vpop.permute.xlu0 %458
      %460 = vrot.lane.b32.xlu0 %v175, 52
      %v461 = vpop.permute.xlu0 %460
      %vm462 = vcmp.lt.s32.totalorder %v191, 52
      %v463 = vsel %vm462, %v455, %v459
      %v464 = vsel %vm462, %v457, %v461
      %v465 = vsel %vm462, %v459, %v455
      %v466 = vsel %vm462, %v461, %v457
      %v467 = vlaneseq
      %v468 = vshrl.u32 %v467, 7
      %v469 = vsub.s32 2, %v468
      %v470 = vrot.slane %v180, %v469
      %v471 = vlaneseq
      %v472 = vshrl.u32 %v471, 7
      %v473 = vsub.s32 2, %v472
      %v474 = vrot.slane %v181, %v473
      %v475 = vmul.f32 %v463, %v470
      %v476 = vmul.f32 %v465, %v474
      %v477 = vmul.f32 %v464, %v470
      %v478 = vmul.f32 %v466, %v474
      %v479 = vpack.c.bf16 %v477, %v475
      %v480 = vpack.c.bf16 %v478, %v476
      %481 = vrot.lane.b32.xlu0 %v172, 12
      %v482 = vpop.permute.xlu0 %481
      %483 = vrot.lane.b32.xlu0 %v174, 12
      %v484 = vpop.permute.xlu0 %483
      %485 = vrot.lane.b32.xlu0 %v173, 12
      %v486 = vpop.permute.xlu0 %485
      %487 = vrot.lane.b32.xlu0 %v175, 12
      %v488 = vpop.permute.xlu0 %487
      %vm489 = vcmp.lt.s32.totalorder %v191, 12
      %v490 = vsel %vm489, %v482, %v486
      %v491 = vsel %vm489, %v484, %v488
      %v492 = vsel %vm489, %v486, %v482
      %v493 = vsel %vm489, %v488, %v484
      %v494 = vlaneseq
      %v495 = vshrl.u32 %v494, 7
      %v496 = vsub.s32 3, %v495
      %v497 = vrot.slane %v180, %v496
      %v498 = vlaneseq
      %v499 = vshrl.u32 %v498, 7
      %v500 = vsub.s32 3, %v499
      %v501 = vrot.slane %v181, %v500
      %v502 = vmul.f32 %v492, %v497
      %v503 = vmul.f32 %v490, %v501
      %v504 = vmul.f32 %v493, %v497
      %v505 = vmul.f32 %v491, %v501
      %v506 = vpack.c.bf16 %v504, %v502
      %v507 = vpack.c.bf16 %v505, %v503
      %508 = vrot.lane.b32.xlu0 %v172, 116
      %v509 = vpop.permute.xlu0 %508
      %510 = vrot.lane.b32.xlu0 %v174, 116
      %v511 = vpop.permute.xlu0 %510
      %512 = vrot.lane.b32.xlu0 %v173, 116
      %v513 = vpop.permute.xlu0 %512
      %514 = vrot.lane.b32.xlu0 %v175, 116
      %v515 = vpop.permute.xlu0 %514
      %vm516 = vcmp.lt.s32.totalorder %v191, 116
      %v517 = vsel %vm516, %v509, %v513
      %v518 = vsel %vm516, %v511, %v515
      %v519 = vsel %vm516, %v513, %v509
      %v520 = vsel %vm516, %v515, %v511
      %v521 = vlaneseq
      %v522 = vshrl.u32 %v521, 7
      %v523 = vsub.s32 4, %v522
      %v524 = vrot.slane %v180, %v523
      %v525 = vlaneseq
      %v526 = vshrl.u32 %v525, 7
      %v527 = vsub.s32 4, %v526
      %v528 = vrot.slane %v181, %v527
      %v529 = vmul.f32 %v517, %v524
      %v530 = vmul.f32 %v519, %v528
      %v531 = vmul.f32 %v518, %v524
      %v532 = vmul.f32 %v520, %v528
      %v533 = vpack.c.bf16 %v531, %v529
      %v534 = vpack.c.bf16 %v532, %v530
      %v535 = vlaneseq
      %v536 = vshrl.u32 %v535, 7
      %v537 = vsub.s32 5, %v536
      %v538 = vrot.slane %v180, %v537
      %v539 = vlaneseq
      %v540 = vshrl.u32 %v539, 7
      %v541 = vsub.s32 5, %v540
      %v542 = vrot.slane %v181, %v541
      %v543 = vmul.f32 %v411, %v538
      %v544 = vmul.f32 %v409, %v542
      %v545 = vmul.f32 %v412, %v538
      %v546 = vmul.f32 %v410, %v542
      %v547 = vpack.c.bf16 %v545, %v543
      %v548 = vpack.c.bf16 %v546, %v544
      %v549 = vlaneseq
      %v550 = vshrl.u32 %v549, 7
      %v551 = vsub.s32 6, %v550
      %v552 = vrot.slane %v180, %v551
      %v553 = vlaneseq
      %v554 = vshrl.u32 %v553, 7
      %v555 = vsub.s32 6, %v554
      %v556 = vrot.slane %v181, %v555
      %v557 = vmul.f32 %v438, %v552
      %v558 = vmul.f32 %v436, %v556
      %v559 = vmul.f32 %v439, %v552
      %v560 = vmul.f32 %v437, %v556
      %v561 = vpack.c.bf16 %v559, %v557
      %v562 = vpack.c.bf16 %v560, %v558
      %v563 = vlaneseq
      %v564 = vshrl.u32 %v563, 7
      %v565 = vsub.s32 7, %v564
      %v566 = vrot.slane %v180, %v565
      %v567 = vlaneseq
      %v568 = vshrl.u32 %v567, 7
      %v569 = vsub.s32 7, %v568
      %v570 = vrot.slane %v181, %v569
      %v571 = vmul.f32 %v465, %v566
      %v572 = vmul.f32 %v463, %v570
      %v573 = vmul.f32 %v466, %v566
      %v574 = vmul.f32 %v464, %v570
      %v575 = vpack.c.bf16 %v573, %v571
      %v576 = vpack.c.bf16 %v574, %v572
      %v577 = vld [vmem:[%s1] sm:$0xff]
      %v578 = vld [vmem:[%s1 + $0x8] sm:$0xf]
      %v579 = vld [vmem:[%s1 + $0xc] sm:$0xff]
      %v580 = vld [vmem:[%s1 + $0x14] sm:$0xf]
      %v581 = vld [vmem:[%s1 + $0x18] sm:$0xff]
      %v582 = vld [vmem:[%s1 + $0x20] sm:$0xf]
      %v583 = vld [vmem:[%s1 + $0x24] sm:$0xff]
      %v584 = vld [vmem:[%s1 + $0x2c] sm:$0xf]
      %v585 = vld [vmem:[%s1 + $0x30] sm:$0xff]
      %v586 = vld [vmem:[%s1 + $0x38] sm:$0xf]
      %v597 = vunpack.c.l.b16 %v577
      %v598 = vunpack.c.h.b16 %v577
      %v599 = vunpack.c.l.b16 %v578
      %v600 = vunpack.c.l.b16 %v579
      %v601 = vunpack.c.h.b16 %v579
      %v602 = vunpack.c.l.b16 %v580
      %v603 = vunpack.c.l.b16 %v581
      %v604 = vunpack.c.h.b16 %v581
      %v605 = vunpack.c.l.b16 %v582
      %v606 = vunpack.c.l.b16 %v583
      %v607 = vunpack.c.h.b16 %v583
      %v608 = vunpack.c.l.b16 %v584
      %v609 = vunpack.c.l.b16 %v585
      %v610 = vunpack.c.h.b16 %v585
      %v611 = vunpack.c.l.b16 %v586
      %v612 = vpack.c.b16 %v600, %v597
      %v613 = vpack.c.b16 %v601, %v598
      %v614 = vpack.c.b16 %v602, %v599
      %v615 = vpack.c.b16 %v606, %v603
      %v616 = vpack.c.b16 %v607, %v604
      %v617 = vpack.c.b16 %v608, %v605
      %v618 = vpack.c.b16 %v609, %v609
      %v619 = vpack.c.b16 %v610, %v610
      %v620 = vpack.c.b16 %v611, %v611
      %vm627 = vcmask 130048
      %v629 = vsel %vm627, %v614, 0
      %v632 = vsel %vm627, %v617, 0
      %v635 = vsel %vm627, %v620, 0
      %637 = vmatprep.subr.bf16.mxu0 %v177
      %638 = vmatpush1.bf16.msra.mxu0 %v176
      %639 = vmatprep.subr.bf16.mxu0 %v210
      %640 = vmatpush1.bf16.msra.mxu0 %v209
      %641 = vmatprep.subr.bf16.mxu0 %v237
      %642 = vmatpush1.bf16.msra.mxu0 %v236
      %643 = vmatprep.subr.bf16.mxu0 %v264
      %644 = vmatpush1.bf16.msra.mxu0 %v263
      %645 = vmatprep.subr.bf16.mxu0 %v291
      %646 = vmatpush1.bf16.msra.mxu0 %v290
      %647 = vmatprep.subr.bf16.mxu0 %v318
      %648 = vmatpush1.bf16.msra.mxu0 %v317
      %649 = vmatprep.subr.bf16.mxu0 %v345
      %650 = vmatpush1.bf16.msra.mxu0 %v344
      %651 = vmatprep.subr.bf16.mxu0 %v372
      %652 = vmatpush1.bf16.msra.mxu0 %v371
      %653 = vmatprep.subr.bf16.mxu0 %v399
      %654 = vmatpush1.bf16.msra.mxu0 %v398
      %655 = vmatprep.subr.bf16.mxu0 %v426
      %656 = vmatpush1.bf16.msra.mxu0 %v425
      %657 = vmatprep.subr.bf16.mxu0 %v453
      %658 = vmatpush1.bf16.msra.mxu0 %v452
      %659 = vmatprep.subr.bf16.mxu0 %v480
      %660 = vmatpush1.bf16.msra.mxu0 %v479
      %661 = vmatprep.subr.bf16.mxu0 %v507
      %662 = vmatpush1.bf16.msra.mxu0 %v506
      %663 = vmatprep.subr.bf16.mxu0 %v534
      %664 = vmatpush1.bf16.msra.mxu0 %v533
      %665 = vmatprep.subr.bf16.mxu0 %v548
      %666 = vmatpush1.bf16.msra.mxu0 %v547
      %667 = vmatprep.subr.bf16.mxu0 %v562
      %668 = vmatpush1.bf16.msra.mxu0 %v561
      %669 = vmatprep.mubr.bf16.mxu0 %v613
      %670 = vmatmul.mubr.bf16.gmra.mrb[0].mxu0 %v612
      %v671 = vpop.f32.mrb[0].mxu0
      %v672 = vadd.f32 0.0, %v671
      %v673 = vpop.f32.mrb[0].mxu0
      %v674 = vadd.f32 0.0, %v673
      %v675 = vpop.f32.mrb[0].mxu0
      %v676 = vadd.f32 0.0, %v675
      %v677 = vpop.f32.mrb[0].mxu0
      %v678 = vadd.f32 0.0, %v677
      %679 = vmatprep.mubr.bf16.mxu0 %v616
      %680 = vmatmul.mubr.bf16.gmra.mrb[0].mxu0 %v615
      %v681 = vpop.f32.mrb[0].mxu0
      %v682 = vadd.f32 0.0, %v681
      %v683 = vpop.f32.mrb[0].mxu0
      %v684 = vadd.f32 0.0, %v683
      %v685 = vpop.f32.mrb[0].mxu0
      %v686 = vadd.f32 0.0, %v685
      %v687 = vpop.f32.mrb[0].mxu0
      %v688 = vadd.f32 0.0, %v687
      %689 = vmatprep.mubr.bf16.mxu0 %v619
      %690 = vmatmul.mubr.bf16.gmra.mrb[0].mxu0 %v618
      %v691 = vpop.f32.mrb[0].mxu0
      %v692 = vadd.f32 0.0, %v691
      %v693 = vpop.f32.mrb[0].mxu0
      %v694 = vadd.f32 0.0, %v693
      %v695 = vpop.f32.mrb[0].mxu0
      %v696 = vpop.f32.mrb[0].mxu0
      %697 = vdwg.mxu0
      %698 = vmatprep.subr.bf16.mxu0 %v576
      %699 = vmatpush1.bf16.msra.mxu0 %v575
      %700 = vmatprep.subr.bf16.mxu0 0
      %701 = vmatpush1.bf16.msra.mxu0 0
      %702 = vmatprep.subr.bf16.mxu0 0
      %703 = vmatpush1.bf16.msra.mxu0 0
      %704 = vmatprep.subr.bf16.mxu0 0
      %705 = vmatpush1.bf16.msra.mxu0 0
      %706 = vmatprep.subr.bf16.mxu0 0
      %707 = vmatpush1.bf16.msra.mxu0 0
      %708 = vmatprep.subr.bf16.mxu0 0
      %709 = vmatpush1.bf16.msra.mxu0 0
      %710 = vmatprep.subr.bf16.mxu0 0
      %711 = vmatpush1.bf16.msra.mxu0 0
      %712 = vmatprep.subr.bf16.mxu0 0
      %713 = vmatpush1.bf16.msra.mxu0 0
      %714 = vmatprep.subr.bf16.mxu0 0
      %715 = vmatpush1.bf16.msra.mxu0 0
      %716 = vmatprep.subr.bf16.mxu0 0
      %717 = vmatpush1.bf16.msra.mxu0 0
      %718 = vmatprep.subr.bf16.mxu0 0
      %719 = vmatpush1.bf16.msra.mxu0 0
      %720 = vmatprep.subr.bf16.mxu0 0
      %721 = vmatpush1.bf16.msra.mxu0 0
      %722 = vmatprep.subr.bf16.mxu0 0
      %723 = vmatpush1.bf16.msra.mxu0 0
      %724 = vmatprep.subr.bf16.mxu0 0
      %725 = vmatpush1.bf16.msra.mxu0 0
      %726 = vmatprep.subr.bf16.mxu0 0
      %727 = vmatpush1.bf16.msra.mxu0 0
      %728 = vmatprep.subr.bf16.mxu0 0
      %729 = vmatpush1.bf16.msra.mxu0 0
      %730 = vmatprep.mubr.bf16.mxu0 0
      %731 = vmatmul.mubr.bf16.gmra.mrb[0].mxu0 %v629
      %v732 = vpop.f32.mrb[0].mxu0
      %v733 = vadd.f32 %v672, %v732
      %v734 = vpop.f32.mrb[0].mxu0
      %v735 = vadd.f32 %v674, %v734
      %v736 = vpop.f32.mrb[0].mxu0
      %v737 = vadd.f32 %v676, %v736
      %v738 = vpop.f32.mrb[0].mxu0
      %v739 = vadd.f32 %v678, %v738
      %740 = vmatprep.mubr.bf16.mxu0 0
      %741 = vmatmul.mubr.bf16.gmra.mrb[0].mxu0 %v632
      %v742 = vpop.f32.mrb[0].mxu0
      %v743 = vadd.f32 %v682, %v742
      %v744 = vpop.f32.mrb[0].mxu0
      %v745 = vadd.f32 %v684, %v744
      %v746 = vpop.f32.mrb[0].mxu0
      %v747 = vadd.f32 %v686, %v746
      %v748 = vpop.f32.mrb[0].mxu0
      %v749 = vadd.f32 %v688, %v748
      %750 = vmatprep.mubr.bf16.mxu0 0
      %751 = vmatmul.mubr.bf16.gmra.mrb[0].mxu0 %v635
      %v752 = vpop.f32.mrb[0].mxu0
      %v753 = vadd.f32 %v692, %v752
      %v754 = vpop.f32.mrb[0].mxu0
      %v755 = vadd.f32 %v694, %v754
      %v756 = vpop.f32.mrb[0].mxu0
      %v757 = vpop.f32.mrb[0].mxu0
      %758 = vdwg.mxu0
      %759 = vst [vmem:[%s170] sm:$0xff] %v733
      %760 = vst [vmem:[%s170 + $0x8] sm:$0xff] %v735
      %761 = vst [vmem:[%s170 + $0x10] sm:$0xff] %v737
      %762 = vst [vmem:[%s170 + $0x18] sm:$0xff] %v739
      %763 = vst [vmem:[%s170 + $0x20] sm:$0xff] %v743
      %764 = vst [vmem:[%s170 + $0x28] sm:$0xff] %v745
      %765 = vst [vmem:[%s170 + $0x30] sm:$0xff] %v747
      %766 = vst [vmem:[%s170 + $0x38] sm:$0xff] %v749
      %767 = vst [vmem:[%s170 + $0x40] sm:$0xff] %v753
      %768 = vst [vmem:[%s170 + $0x48] sm:$0xff] %v755
      %p769 = scmp.lt.s32.totalorder %s14, 1
      %s770 = scalar_select %p769, %s14, 1
      %s771 = smul.addr %s770, 10
      %s772 = smul.addr %s771, 8
      %s773 = scalar_lea.vmem %s3, %s772
      // Predicated region
      $region33: #{aspp_center_block.2} parent=31 // pred_check
        %p774 = pneg %p100
      $region34: #{aspp_center_block.2} parent=31 // pred_check_branch
        %776 = sbr.rel (%p774) target = $region36
      $region35: #{aspp_center_block.2} parent=31 // pred_region
        _
      $region36: #{aspp_center_block.2} parent=31 // pred_fallthru
        _
    $region32: #{aspp_center_block.2} parent=5 // pred_fallthru
      _
    %p777 = scmp.le.s32.totalorder 2, %s9
    // Predicated region
    $region37: #{aspp_center_block.2} parent=5 // pred_check
      %p778 = pneg %p777
    $region38: #{aspp_center_block.2} parent=5 // pred_check_branch
      %780 = sbr.rel (%p778) target = $region40
    $region39: #{aspp_center_block.2} parent=5 // pred_region
      %s781 = ssub.s32 %s9, 2
      // Predicated region
      $region41: #{aspp_center_block.2} parent=39 // pred_check
        %p782 = pneg %p106
      $region42: #{aspp_center_block.2} parent=39 // pred_check_branch
        %784 = sbr.rel (%p782) target = $region44
      $region43: #{aspp_center_block.2} parent=39 // pred_region
        %p785 = scmp.lt.s32.totalorder %s15, 1
        %s786 = scalar_select %p785, %s15, 1
        %s787 = smul.addr %s786, 10
        %s788 = smul.addr %s787, 8
        %s789 = scalar_lea.vmem %s3, %s788
      $region44: #{aspp_center_block.2} parent=39 // pred_fallthru
        _
    $region40: #{aspp_center_block.2} parent=5 // pred_fallthru
      _
  $region6: #{aspp_center_block.2} parent=0 // loop_footer
    %s13 = sadd.s32 1, %s9
  $region7: #{aspp_center_block.2} parent=0 // loop_footer_branch
    %8 = sbr.rel target = $region3
  $region8: #{aspp_center_block.2} parent=0 // loop_exit
    _

// kernel: aspp_center_block.3
$region0: #{aspp_center_block.3}
  #allocation0 [shape = 'u32[]', space=smem, size = 0x4, offset = 0x4, fixed_abs, tag = 'smem constant byte address 0x4 - core index']
  #allocation1 [shape = 'u32[144,128]{1,0:T(1,128)}', space=vmem, size = 0x12000, scoped, tag = 'internal scratch']
  %s0 = inlined_call_operand.vmem [shape: f32[2,40,256], index: 0, kind: input, shape index: {}]
  %s1 = inlined_call_operand.vmem [shape: f32[2,8,1], index: 1, kind: input, shape index: {}]
  %s2 = inlined_call_operand.vmem [shape: f32[40,1], index: 2, kind: input, shape index: {}]
  %s3 = inlined_call_operand.vmem [shape: f32[40,1], index: 3, kind: input, shape index: {}]
  %s4 = inlined_call_operand.vmem [shape: bf16[8,40], index: 4, kind: input, shape index: {}]
  %s5 = inlined_call_operand.vmem [shape: f32[2,8,256], index: 5, kind: output, shape index: {}]
  %s6 = sld [smem:[#allocation0]]
  $region53: #{aspp_center_block.3} parent=0
    _
  %s8 = ssub.s32 1, %s6
  %s9 = scalar_select 0, %s8, %s6
  loop: start=0, step=1, limit=4
  $region2: #{aspp_center_block.3} parent=0 // loop_pre_header
    _
  $region3: #{aspp_center_block.3} parent=0 // loop_header
    %s11 = sphi 0, %s15
    %p12 = scmp.ge.s32.totalorder %s11, 4
    %s21 = sphi 0, %s23
    %s24 = sphi 0, %s21
    %s25 = sphi 0, %s24
    %s41 = sphi 0, %s25
    %s47 = sphi 0, %s49
    %s50 = sphi 0, %s47
    %s51 = sphi 0, %s50
    %s67 = sphi 0, %s51
    %s71 = sphi 0, %s71
    %s73 = sphi 0, %s71
    %s74 = sphi 0, %s73
    %s88 = sphi 0, %s74
    %s92 = sphi 0, %s92
    %s94 = sphi 0, %s92
    %s95 = sphi 0, %s94
    %s109 = sphi 0, %s95
    %s113 = sphi 0, %s113
    %s115 = sphi 0, %s113
    %s116 = sphi 0, %s115
    %s130 = sphi 0, %s116
    %s136 = sphi 0, %s138
    %s139 = sphi 0, %s136
    %s140 = sphi 0, %s139
    %s156 = sphi 0, %s140
  $region4: #{aspp_center_block.3} parent=0 // loop_header_branch
    %14 = sbr.rel (%p12) target = $region8
  $region5: #{aspp_center_block.3} parent=0 // loop_body
    %s16 = ssub.s32 %s11, 1
    %s17 = ssub.s32 %s11, 2
    %s18 = sadd.s32 %s11, 1
    %s19 = ssub.s32 %s11, %s18
    %p20 = scmp.eq.s32.totalorder %s19, 0
    %s22 = sadd.s32 %s21, 1
    %s23 = scalar_select %p20, %s21, %s22
    %p26 = pneg %p20
    %p27 = scmp.eq.s32.totalorder %s11, 1
    %p28 = por %p26, %p27
    %p29 = scmp.ne.s32.totalorder %s21, %s24
    %p30 = scmp.eq.s32.totalorder %s11, 0
    %p31 = por %p29, %p30
    %p32 = scmp.ne.s32.totalorder %s21, %s24
    %p33 = scmp.eq.s32.totalorder %s16, 1
    %p34 = por %p32, %p33
    %p35 = scmp.ne.s32.totalorder %s24, %s25
    %p36 = scmp.eq.s32.totalorder %s16, 0
    %p37 = por %p35, %p36
    %p38 = scmp.ne.s32.totalorder %s24, %s25
    %p39 = scmp.eq.s32.totalorder %s17, 1
    %p40 = por %p38, %p39
    %p42 = scmp.ne.s32.totalorder %s25, %s41
    %p43 = scmp.eq.s32.totalorder %s17, 0
    %p44 = por %p42, %p43
    %s45 = ssub.s32 %s11, %s18
    %p46 = scmp.eq.s32.totalorder %s45, 0
    %s48 = sadd.s32 %s47, 1
    %s49 = scalar_select %p46, %s47, %s48
    %p52 = pneg %p46
    %p53 = scmp.eq.s32.totalorder %s11, 1
    %p54 = por %p52, %p53
    %p55 = scmp.ne.s32.totalorder %s47, %s50
    %p56 = scmp.eq.s32.totalorder %s11, 0
    %p57 = por %p55, %p56
    %p58 = scmp.ne.s32.totalorder %s47, %s50
    %p59 = scmp.eq.s32.totalorder %s16, 1
    %p60 = por %p58, %p59
    %p61 = scmp.ne.s32.totalorder %s50, %s51
    %p62 = scmp.eq.s32.totalorder %s16, 0
    %p63 = por %p61, %p62
    %p64 = scmp.ne.s32.totalorder %s50, %s51
    %p65 = scmp.eq.s32.totalorder %s17, 1
    %p66 = por %p64, %p65
    %p68 = scmp.ne.s32.totalorder %s51, %s67
    %p69 = scmp.eq.s32.totalorder %s17, 0
    %p70 = por %p68, %p69
    %s72 = sadd.s32 %s71, 1
    %p75 = scmp.eq.s32.totalorder %s11, 1
    %p76 = scmp.ne.s32.totalorder %s71, %s73
    %p77 = scmp.eq.s32.totalorder %s11, 0
    %p78 = por %p76, %p77
    %p79 = scmp.ne.s32.totalorder %s71, %s73
    %p80 = scmp.eq.s32.totalorder %s16, 1
    %p81 = por %p79, %p80
    %p82 = scmp.ne.s32.totalorder %s73, %s74
    %p83 = scmp.eq.s32.totalorder %s16, 0
    %p84 = por %p82, %p83
    %p85 = scmp.ne.s32.totalorder %s73, %s74
    %p86 = scmp.eq.s32.totalorder %s17, 1
    %p87 = por %p85, %p86
    %p89 = scmp.ne.s32.totalorder %s74, %s88
    %p90 = scmp.eq.s32.totalorder %s17, 0
    %p91 = por %p89, %p90
    %s93 = sadd.s32 %s92, 1
    %p96 = scmp.eq.s32.totalorder %s11, 1
    %p97 = scmp.ne.s32.totalorder %s92, %s94
    %p98 = scmp.eq.s32.totalorder %s11, 0
    %p99 = por %p97, %p98
    %p100 = scmp.ne.s32.totalorder %s92, %s94
    %p101 = scmp.eq.s32.totalorder %s16, 1
    %p102 = por %p100, %p101
    %p103 = scmp.ne.s32.totalorder %s94, %s95
    %p104 = scmp.eq.s32.totalorder %s16, 0
    %p105 = por %p103, %p104
    %p106 = scmp.ne.s32.totalorder %s94, %s95
    %p107 = scmp.eq.s32.totalorder %s17, 1
    %p108 = por %p106, %p107
    %p110 = scmp.ne.s32.totalorder %s95, %s109
    %p111 = scmp.eq.s32.totalorder %s17, 0
    %p112 = por %p110, %p111
    %s114 = sadd.s32 %s113, 1
    %p117 = scmp.eq.s32.totalorder %s11, 1
    %p118 = scmp.ne.s32.totalorder %s113, %s115
    %p119 = scmp.eq.s32.totalorder %s11, 0
    %p120 = por %p118, %p119
    %p121 = scmp.ne.s32.totalorder %s113, %s115
    %p122 = scmp.eq.s32.totalorder %s16, 1
    %p123 = por %p121, %p122
    %p124 = scmp.ne.s32.totalorder %s115, %s116
    %p125 = scmp.eq.s32.totalorder %s16, 0
    %p126 = por %p124, %p125
    %p127 = scmp.ne.s32.totalorder %s115, %s116
    %p128 = scmp.eq.s32.totalorder %s17, 1
    %p129 = por %p127, %p128
    %p131 = scmp.ne.s32.totalorder %s116, %s130
    %p132 = scmp.eq.s32.totalorder %s17, 0
    %p133 = por %p131, %p132
    %s134 = ssub.s32 %s11, %s18
    %p135 = scmp.eq.s32.totalorder %s134, 0
    %s137 = sadd.s32 %s136, 1
    %s138 = scalar_select %p135, %s136, %s137
    %p141 = pneg %p135
    %p142 = scmp.eq.s32.totalorder %s11, 1
    %p143 = por %p141, %p142
    %p144 = scmp.ne.s32.totalorder %s136, %s139
    %p145 = scmp.eq.s32.totalorder %s11, 0
    %p146 = por %p144, %p145
    %p147 = scmp.ne.s32.totalorder %s136, %s139
    %p148 = scmp.eq.s32.totalorder %s16, 1
    %p149 = por %p147, %p148
    %p150 = scmp.ne.s32.totalorder %s139, %s140
    %p151 = scmp.eq.s32.totalorder %s16, 0
    %p152 = por %p150, %p151
    %p153 = scmp.ne.s32.totalorder %s139, %s140
    %p154 = scmp.eq.s32.totalorder %s17, 1
    %p155 = por %p153, %p154
    %p157 = scmp.ne.s32.totalorder %s140, %s156
    %p158 = scmp.eq.s32.totalorder %s17, 0
    %p159 = por %p157, %p158
    %p160 = scmp.le.s32.totalorder 1, %s11
    %p161 = scmp.lt.s32.totalorder %s11, 3
    %p162 = pnand %p160, %p161
    %p163 = pneg %p162
    // Predicated region
    $region9: #{aspp_center_block.3} parent=5 // pred_check
      _
    $region10: #{aspp_center_block.3} parent=5 // pred_check_branch
      %165 = sbr.rel (%p162) target = $region12
    $region11: #{aspp_center_block.3} parent=5 // pred_region
      %s166 = ssub.s32 %s11, 1
      // Predicated region
      $region13: #{aspp_center_block.3} parent=11 // pred_check
        %p167 = pneg %p84
      $region14: #{aspp_center_block.3} parent=11 // pred_check_branch
        %169 = sbr.rel (%p167) target = $region16
      $region15: #{aspp_center_block.3} parent=11 // pred_region
        _
      $region16: #{aspp_center_block.3} parent=11 // pred_fallthru
        _
      // Predicated region
      $region17: #{aspp_center_block.3} parent=11 // pred_check
        %p170 = pneg %p105
      $region18: #{aspp_center_block.3} parent=11 // pred_check_branch
        %172 = sbr.rel (%p170) target = $region20
      $region19: #{aspp_center_block.3} parent=11 // pred_region
        _
      $region20: #{aspp_center_block.3} parent=11 // pred_fallthru
        _
      // Predicated region
      $region21: #{aspp_center_block.3} parent=11 // pred_check
        %p173 = pneg %p126
      $region22: #{aspp_center_block.3} parent=11 // pred_check_branch
        %175 = sbr.rel (%p173) target = $region24
      $region23: #{aspp_center_block.3} parent=11 // pred_region
        _
      $region24: #{aspp_center_block.3} parent=11 // pred_fallthru
        _
    $region12: #{aspp_center_block.3} parent=5 // pred_fallthru
      _
    %p176 = scmp.lt.s32.totalorder %s11, 2
    // Predicated region
    $region25: #{aspp_center_block.3} parent=5 // pred_check
      %p177 = pneg %p176
    $region26: #{aspp_center_block.3} parent=5 // pred_check_branch
      %179 = sbr.rel (%p177) target = $region28
    $region27: #{aspp_center_block.3} parent=5 // pred_region
      // Predicated region
      $region29: #{aspp_center_block.3} parent=27 // pred_check
        %p180 = pneg %p31
      $region30: #{aspp_center_block.3} parent=27 // pred_check_branch
        %182 = sbr.rel (%p180) target = $region32
      $region31: #{aspp_center_block.3} parent=27 // pred_region
        %p183 = scmp.lt.s32.totalorder %s11, 1
        %s184 = scalar_select %p183, %s11, 1
        %s185 = smul.addr %s184, 10
        %s186 = smul.addr %s185, 8
        %s187 = scalar_lea.vmem %s0, %s186
      $region32: #{aspp_center_block.3} parent=27 // pred_fallthru
        _
      // Predicated region
      $region33: #{aspp_center_block.3} parent=27 // pred_check
        %p188 = pneg %p57
      $region34: #{aspp_center_block.3} parent=27 // pred_check_branch
        %190 = sbr.rel (%p188) target = $region36
      $region35: #{aspp_center_block.3} parent=27 // pred_region
        %p191 = scmp.lt.s32.totalorder %s11, 1
        %s192 = scalar_select %p191, %s11, 1
        %s193 = smul.addr %s192, 8
        %s194 = scalar_lea.vmem %s1, %s193
      $region36: #{aspp_center_block.3} parent=27 // pred_fallthru
        _
    $region28: #{aspp_center_block.3} parent=5 // pred_fallthru
      _
    %p195 = scmp.le.s32.totalorder 1, %s11
    %p196 = scmp.lt.s32.totalorder %s11, 3
    %p197 = pnand %p195, %p196
    %p198 = pneg %p197
    // Predicated region
    $region37: #{aspp_center_block.3} parent=5 // pred_check
      _
    $region38: #{aspp_center_block.3} parent=5 // pred_check_branch
      %200 = sbr.rel (%p197) target = $region40
    $region39: #{aspp_center_block.3} parent=5 // pred_region
      %s201 = ssub.s32 %s11, 1
      %p202 = scmp.lt.s32.totalorder %s16, 1
      %s203 = scalar_select %p202, %s16, 1
      %s204 = smul.addr %s203, 10
      %s205 = smul.addr %s204, 8
      %s206 = scalar_lea.vmem %s0, %s205
      %p207 = pneg %p37
      %p208 = pneg %p34
      %p209 = scmp.lt.s32.totalorder %s16, 1
      %s210 = scalar_select %p209, %s16, 1
      %s211 = smul.addr %s210, 8
      %s212 = scalar_lea.vmem %s1, %s211
      %p213 = pneg %p63
      %p214 = pneg %p60
      %p215 = pneg %p84
      %p216 = pneg %p81
      %p217 = pneg %p105
      %p218 = pneg %p102
      %p219 = pneg %p126
      %p220 = pneg %p123
      %p221 = pneg %p152
      %p222 = pneg %p149
      %p223 = scmp.lt.s32.totalorder %s16, 1
      %s224 = scalar_select %p223, %s16, 1
      %s225 = smul.addr %s224, 2
      %s226 = smul.addr %s225, 8
      %s227 = scalar_lea.vmem %s5, %s226
      %p228 = scmp.lt.s32.totalorder %s16, 1
      %s229 = scalar_select %p228, %s16, 1
      %s230 = smul.addr %s229, 10
      %s231 = smul.addr %s230, 8
      %s232 = scalar_lea.vmem %s0, %s231
      %p233 = scmp.lt.s32.totalorder %s16, 1
      %s234 = scalar_select %p233, %s16, 1
      %s235 = smul.addr %s234, 8
      %s236 = scalar_lea.vmem %s1, %s235
      %p237 = scmp.lt.s32.totalorder %s16, 1
      %s238 = scalar_select %p237, %s16, 1
      %s239 = smul.addr %s238, 2
      %s240 = smul.addr %s239, 8
      %s241 = scalar_lea.vmem %s5, %s240
      %v243 = vld [vmem:[%s232] sm:$0xff]
      %v244 = vld [vmem:[%s232 + $0x8] sm:$0xff]
      %v245 = vld [vmem:[%s232 + $0x10] sm:$0xff]
      %v246 = vld [vmem:[%s232 + $0x18] sm:$0xff]
      %v247 = vld [vmem:[%s232 + $0x20] sm:$0xff]
      %v248 = vld [vmem:[%s232 + $0x28] sm:$0xff]
      %v249 = vld [vmem:[%s232 + $0x30] sm:$0xff]
      %v250 = vld [vmem:[%s232 + $0x38] sm:$0xff]
      %v251 = vld [vmem:[%s232 + $0x40] sm:$0xff]
      %v252 = vld [vmem:[%s232 + $0x48] sm:$0xff]
      %v253 = vld [vmem:[%s2] sm:$0xff]
      %v254 = vld [vmem:[%s2 + $0x8] sm:$0xff]
      %v255 = vld [vmem:[%s2 + $0x10] sm:$0xff]
      %v256 = vld [vmem:[%s2 + $0x18] sm:$0xff]
      %v257 = vld [vmem:[%s2 + $0x20] sm:$0xff]
      %259 = vset.pattern.permute.xlu0 0
      %260 = vperm.xlu0 %259, %v253
      %v261 = vpop.permute.xlu0 %260
      %264 = vset.pattern.permute.xlu0 0
      %265 = vperm.xlu0 %264, %v254
      %v266 = vpop.permute.xlu0 %265
      %269 = vset.pattern.permute.xlu0 0
      %270 = vperm.xlu0 %269, %v255
      %v271 = vpop.permute.xlu0 %270
      %274 = vset.pattern.permute.xlu0 0
      %275 = vperm.xlu0 %274, %v256
      %v276 = vpop.permute.xlu0 %275
      %279 = vset.pattern.permute.xlu0 0
      %280 = vperm.xlu0 %279, %v257
      %v281 = vpop.permute.xlu0 %280
      %v283 = vmul.f32 %v243, %v261
      %v284 = vmul.f32 %v244, %v261
      %v285 = vmul.f32 %v245, %v266
      %v286 = vmul.f32 %v246, %v266
      %v287 = vmul.f32 %v247, %v271
      %v288 = vmul.f32 %v248, %v271
      %v289 = vmul.f32 %v249, %v276
      %v290 = vmul.f32 %v250, %v276
      %v291 = vmul.f32 %v251, %v281
      %v292 = vmul.f32 %v252, %v281
      %v293 = vld [vmem:[%s3] sm:$0xff]
      %v294 = vld [vmem:[%s3 + $0x8] sm:$0xff]
      %v295 = vld [vmem:[%s3 + $0x10] sm:$0xff]
      %v296 = vld [vmem:[%s3 + $0x18] sm:$0xff]
      %v297 = vld [vmem:[%s3 + $0x20] sm:$0xff]
      %299 = vset.pattern.permute.xlu0 0
      %300 = vperm.xlu0 %299, %v293
      %v301 = vpop.permute.xlu0 %300
      %304 = vset.pattern.permute.xlu0 0
      %305 = vperm.xlu0 %304, %v294
      %v306 = vpop.permute.xlu0 %305
      %309 = vset.pattern.permute.xlu0 0
      %310 = vperm.xlu0 %309, %v295
      %v311 = vpop.permute.xlu0 %310
      %314 = vset.pattern.permute.xlu0 0
      %315 = vperm.xlu0 %314, %v296
      %v316 = vpop.permute.xlu0 %315
      %319 = vset.pattern.permute.xlu0 0
      %320 = vperm.xlu0 %319, %v297
      %v321 = vpop.permute.xlu0 %320
      %v323 = vadd.f32 %v283, %v301
      %v324 = vadd.f32 %v284, %v301
      %v325 = vadd.f32 %v285, %v306
      %v326 = vadd.f32 %v286, %v306
      %v327 = vadd.f32 %v287, %v311
      %v328 = vadd.f32 %v288, %v311
      %v329 = vadd.f32 %v289, %v316
      %v330 = vadd.f32 %v290, %v316
      %v331 = vadd.f32 %v291, %v321
      %v332 = vadd.f32 %v292, %v321
      %v333 = vmax.f32 %v323, 0.0
      %v334 = vmax.f32 %v324, 0.0
      %v335 = vmax.f32 %v325, 0.0
      %v336 = vmax.f32 %v326, 0.0
      %v337 = vmax.f32 %v327, 0.0
      %v338 = vmax.f32 %v328, 0.0
      %v339 = vmax.f32 %v329, 0.0
      %v340 = vmax.f32 %v330, 0.0
      %v341 = vmax.f32 %v331, 0.0
      %v342 = vmax.f32 %v332, 0.0
      %v343 = vld [vmem:[%s4] sm:$0xf]
      %v344 = vpack.c.bf16 %v335, %v333
      %v345 = vpack.c.bf16 %v336, %v334
      %v346 = vpack.c.bf16 %v339, %v337
      %v347 = vpack.c.bf16 %v340, %v338
      %v348 = vpack.c.bf16 %v341, %v341
      %v349 = vpack.c.bf16 %v342, %v342
      %v350 = vld [vmem:[%s236] sm:$0xff]
      %352 = vset.pattern.permute.xlu0 0
      %353 = vperm.xlu0 %352, %v350
      %v354 = vpop.permute.xlu0 %353
      %vm356 = vcmask 326656
      %v358 = vsel %vm356, %v343, 0
      %vm360 = vcmask 1043456
      %v362 = vsel %vm360, %v348, 0
      %v365 = vsel %vm360, %v349, 0
      %367 = vmatprep.subr.bf16.mxu0 %v345
      %368 = vmatpush1.bf16.msra.mxu0 %v344
      %369 = vmatprep.subr.bf16.mxu0 %v347
      %370 = vmatpush1.bf16.msra.mxu0 %v346
      %371 = vmatprep.subr.bf16.mxu0 %v365
      %372 = vmatpush1.bf16.msra.mxu0 %v362
      %373 = vmatprep.subr.bf16.mxu0 0
      %374 = vmatpush1.bf16.msra.mxu0 0
      %375 = vmatprep.subr.bf16.mxu0 0
      %376 = vmatpush1.bf16.msra.mxu0 0
      %377 = vmatprep.subr.bf16.mxu0 0
      %378 = vmatpush1.bf16.msra.mxu0 0
      %379 = vmatprep.subr.bf16.mxu0 0
      %380 = vmatpush1.bf16.msra.mxu0 0
      %381 = vmatprep.subr.bf16.mxu0 0
      %382 = vmatpush1.bf16.msra.mxu0 0
      %383 = vmatprep.subr.bf16.mxu0 0
      %384 = vmatpush1.bf16.msra.mxu0 0
      %385 = vmatprep.subr.bf16.mxu0 0
      %386 = vmatpush1.bf16.msra.mxu0 0
      %387 = vmatprep.subr.bf16.mxu0 0
      %388 = vmatpush1.bf16.msra.mxu0 0
      %389 = vmatprep.subr.bf16.mxu0 0
      %390 = vmatpush1.bf16.msra.mxu0 0
      %391 = vmatprep.subr.bf16.mxu0 0
      %392 = vmatpush1.bf16.msra.mxu0 0
      %393 = vmatprep.subr.bf16.mxu0 0
      %394 = vmatpush1.bf16.msra.mxu0 0
      %395 = vmatprep.subr.bf16.mxu0 0
      %396 = vmatpush1.bf16.msra.mxu0 0
      %397 = vmatprep.subr.bf16.mxu0 0
      %398 = vmatpush1.bf16.msra.mxu0 0
      %399 = vmatprep.mubr.bf16.mxu0 0
      %400 = vmatmul.mubr.bf16.gmra.mrb[0].mxu0 %v358
      %v401 = vpop.f32.mrb[0].mxu0
      %v402 = vadd.f32 %v354, %v401
      %v403 = vpop.f32.mrb[0].mxu0
      %v404 = vadd.f32 %v354, %v403
      %v405 = vpop.f32.mrb[0].mxu0
      %v406 = vpop.f32.mrb[0].mxu0
      %407 = vdwg.mxu0
      %408 = vst [vmem:[%s241] sm:$0xff] %v402
      %409 = vst [vmem:[%s241 + $0x8] sm:$0xff] %v404
      %p410 = scmp.lt.s32.totalorder %s16, 1
      %s411 = scalar_select %p410, %s16, 1
      %s412 = smul.addr %s411, 2
      %s413 = smul.addr %s412, 8
      %s414 = scalar_lea.vmem %s5, %s413
      // Predicated region
      $region41: #{aspp_center_block.3} parent=39 // pred_check
        %p415 = pneg %p149
      $region42: #{aspp_center_block.3} parent=39 // pred_check_branch
        %417 = sbr.rel (%p415) target = $region44
      $region43: #{aspp_center_block.3} parent=39 // pred_region
        _
      $region44: #{aspp_center_block.3} parent=39 // pred_fallthru
        _
    $region40: #{aspp_center_block.3} parent=5 // pred_fallthru
      _
    %p418 = scmp.le.s32.totalorder 2, %s11
    // Predicated region
    $region45: #{aspp_center_block.3} parent=5 // pred_check
      %p419 = pneg %p418
    $region46: #{aspp_center_block.3} parent=5 // pred_check_branch
      %421 = sbr.rel (%p419) target = $region48
    $region47: #{aspp_center_block.3} parent=5 // pred_region
      %s422 = ssub.s32 %s11, 2
      // Predicated region
      $region49: #{aspp_center_block.3} parent=47 // pred_check
        %p423 = pneg %p155
      $region50: #{aspp_center_block.3} parent=47 // pred_check_branch
        %425 = sbr.rel (%p423) target = $region52
      $region51: #{aspp_center_block.3} parent=47 // pred_region
        %p426 = scmp.lt.s32.totalorder %s17, 1
        %s427 = scalar_select %p426, %s17, 1
        %s428 = smul.addr %s427, 2
        %s429 = smul.addr %s428, 8
        %s430 = scalar_lea.vmem %s5, %s429
      $region52: #{aspp_center_block.3} parent=47 // pred_fallthru
        _
    $region48: #{aspp_center_block.3} parent=5 // pred_fallthru
      _
  $region6: #{aspp_center_block.3} parent=0 // loop_footer
    %s15 = sadd.s32 1, %s11
  $region7: #{aspp_center_block.3} parent=0 // loop_footer_branch
    %10 = sbr.rel target = $region3
  $region8: #{aspp_center_block.3} parent=0 // loop_exit
    _

</llo_original>
